<compile_context>
chip_gen: v7x
topology: tpu7x:2x2x1
jax: 0.10.0
libtpu: 0.0.40
codegen_flags: <defaults>
</compile_context>

<pallas_src>
import jax
import jax.numpy as jnp
from jax.experimental import pallas as pl
from jax.experimental.pallas import tpu as pltpu

LANE = 128  # TPU lane width: pad all feature dims to a multiple of this.


# ----------------------------- fused kernel -------------------------------- #

def _make_fused_kernel(n_layers):
    """Fused SPSAGE forward kernel for n_layers >= 2 (n_layers + 1 sampled blocks)."""
    n_adj = n_layers + 1

    def kernel(*refs):
        adj_refs = refs[:n_adj]
        x_ref = refs[n_adj]
        ws_refs = refs[n_adj + 1: n_adj + 1 + n_layers]                   # W_self  (padded)
        wn_refs = refs[n_adj + 1 + n_layers: n_adj + 1 + 2 * n_layers]    # W_neigh (padded)
        b_refs = refs[n_adj + 1 + 2 * n_layers: n_adj + 1 + 3 * n_layers]
        o_ref = refs[n_adj + 1 + 3 * n_layers]

        def combine(h_dst_bf16, h_neigh_f32, ws_ref, wn_ref, b_ref, relu):
            # dot(h_dst, W_self) + dot(h_neigh, W_neigh): two MXU matmuls, f32 accumulate.
            # No lane-axis concat (F < 128 -> concat would be pure relayout cost).
            out = jnp.dot(h_dst_bf16, ws_ref[...], preferred_element_type=jnp.float32)
            out = out + jnp.dot(h_neigh_f32.astype(jnp.bfloat16), wn_ref[...],
                                preferred_element_type=jnp.float32)
            out = out + b_ref[...]                    # f32 epilogue: bias (+ relu)
            if relu:
                out = jnp.maximum(out, 0.0)
            return out

        # ---- layer 0: SPSAGEConv('mean') over blocks[0:2] (two-hop aggregation) ----
        x = x_ref[...]                                                     # bf16 (N0, Fp)
        h_mid = jnp.dot(adj_refs[0][...], x,
                        preferred_element_type=jnp.float32)                # (N1, Fp) f32
        h_neigh = jnp.dot(adj_refs[1][...], h_mid.astype(jnp.bfloat16),
                          preferred_element_type=jnp.float32)              # (N2, Fp) f32
        n_dst = adj_refs[1].shape[0]
        # DGL convention: dst nodes are a prefix of the block's src nodes.
        h = combine(x[:n_dst], h_neigh, ws_refs[0], wn_refs[0], b_refs[0],
                    relu=True)                                             # dropout = id

        # ---- layers 1..: dgl SAGEConv('mean'); last layer has no activation ----
        for l in range(1, n_layers):
            a_ref = adj_refs[l + 1]
            n_dst = a_ref.shape[0]
            h_bf = h.astype(jnp.bfloat16)
            h_neigh = jnp.dot(a_ref[...], h_bf, preferred_element_type=jnp.float32)
            h = combine(h_bf[:n_dst], h_neigh, ws_refs[l], wn_refs[l], b_refs[l],
                        relu=(l != n_layers - 1))

        o_ref[...] = h                                 # lane-dense (padded) f32 store

    return kernel


# ----------------------------- one-time prep -------------------------------- #

def _pad_lane(a, axis):
    n = a.shape[axis]
    pad = pl.cdiv(n, LANE) * LANE - n
    if pad == 0:
        return a
    widths = [(0, 0)] * a.ndim
    widths[axis] = (0, pad)
    return jnp.pad(a, widths)


def prepare_params(params):
    """Init-time weight prep: lane-pad in/out dims to 128 multiples, cast W to bf16."""
    prepped = []
    for p in params:
        ws = _pad_lane(_pad_lane(p["w_self"], 0), 1).astype(jnp.bfloat16)
        wn = _pad_lane(_pad_lane(p["w_neigh"], 0), 1).astype(jnp.bfloat16)
        b = _pad_lane(p["b"].reshape(1, -1).astype(jnp.float32), 1)
        prepped.append({"w_self": ws, "w_neigh": wn, "b": b,
                        "out_dim": p["w_self"].shape[1]})
    return prepped


def prepare_features(x):
    """One-time input-feature prep: lane-pad feature dim to 128 and cast to bf16."""
    return _pad_lane(x, 1).astype(jnp.bfloat16)


# ----------------------------- wrapper -------------------------------------- #

def _full_spec(shape):
    # Whole array as one VMEM block (grid=(1,)); full dims always satisfy the (8,128) rule.
    return pl.BlockSpec(shape, lambda i, _n=len(shape): (0,) * _n)


def spsage_forward(adjs_bf, x_bf, prepped_params):
    """Fused SPSAGE.forward (n_layers >= 2): one pallas_call for the whole layer stack.

    adjs_bf        : n_layers+1 row-normalized dense block adjacencies, already bf16.
    x_bf           : lane-padded bf16 input features (output of prepare_features).
    prepped_params : output of prepare_params (lane-padded bf16 weights, padded f32 bias).
    """
    n_layers = len(prepped_params)
    assert n_layers >= 2 and len(adjs_bf) == n_layers + 1
    n_out_dst = adjs_bf[-1].shape[0]
    n_classes = prepped_params[-1]["out_dim"]
    c_pad = prepped_params[-1]["b"].shape[1]

    operands = (list(adjs_bf) + [x_bf]
                + [p["w_self"] for p in prepped_params]
                + [p["w_neigh"] for p in prepped_params]
                + [p["b"] for p in prepped_params])

    out = pl.pallas_call(
        _make_fused_kernel(n_layers),
        out_shape=jax.ShapeDtypeStruct((n_out_dst, c_pad), jnp.float32),
        grid=(1,),
        in_specs=[_full_spec(op.shape) for op in operands],
        out_specs=_full_spec((n_out_dst, c_pad)),
        compiler_params=pltpu.CompilerParams(
            dimension_semantics=("arbitrary",),
            # tiny footprint here; explicit limit documents the budget for future tiling
            vmem_limit_bytes=32 * 1024 * 1024),
    )(*operands)
    return out[:, :n_classes]


# ----------------------------- reference & data ------------------------------ #

def spsage_reference(adjs, input_feats, params):
    """Pure-JAX f32 reference of the same forward (for correctness checking)."""
    a0, a1 = adjs[0].astype(jnp.float32), adjs[1].astype(jnp.float32)
    h_neigh = a1 @ (a0 @ input_feats)
    h_dst = input_feats[: a1.shape[0]]
    p0 = params[0]
    h = h_dst @ p0["w_self"] + h_neigh @ p0["w_neigh"] + p0["b"]
    h = jnp.maximum(h, 0.0)
    n_layers = len(params)
    for l in range(1, n_layers):
        a = adjs[l + 1].astype(jnp.float32)
        h_neigh = a @ h
        h_dst = h[: a.shape[0]]
        p = params[l]
        h = h_dst @ p["w_self"] + h_neigh @ p["w_neigh"] + p["b"]
        if l != n_layers - 1:
            h = jnp.maximum(h, 0.0)
    return h


def make_mean_adj(key, n_dst, n_src):
    """Row-normalized ('mean' aggregator) dense block adjacency, emitted directly in bf16
    (the sampler produces the kernel operand; no per-forward f32->bf16 round trip)."""
    mask = jax.random.bernoulli(key, p=0.3, shape=(n_dst, n_src)).astype(jnp.float32)
    # guarantee each dst node has at least one in-edge (its own src copy)
    mask = mask.at[jnp.arange(n_dst), jnp.arange(n_dst)].set(1.0)
    deg = jnp.maximum(jnp.sum(mask, axis=1, keepdims=True), 1.0)
    return (mask / deg).astype(jnp.bfloat16)


def init_linear(key, fan_in, fan_out):
    scale = 1.0 / jnp.sqrt(jnp.float32(fan_in))
    return jax.random.normal(key, (fan_in, fan_out), jnp.float32) * scale


# ----------------------------- demo ------------------------------------------ #

if __name__ == "__main__":
    # --- model hyperparameters (args) ---
    fan_out = [5, 5]          # n_layers = 2
    in_feats = 32
    n_hidden = 32
    n_classes = 8

    # --- sampled-subgraph node counts (blocks[:2] for layer0, blocks[2] for layer1) ---
    # bumped (per review) so the matmul M dim is not pure launch/DMA overhead
    N0, N1, N2, N3 = 512, 256, 128, 64

    key = jax.random.PRNGKey(0)
    (k_feat, k_a0, k_a1, k_a2,
     k_w0s, k_w0n, k_b0, k_w1s, k_w1n, k_b1) = jax.random.split(key, 10)

    input_feats = jax.random.normal(k_feat, (N0, in_feats), jnp.float32)
    adjs = [
        make_mean_adj(k_a0, N1, N0),   # block 0
        make_mean_adj(k_a1, N2, N1),   # block 1 (both consumed by SPSAGEConv)
        make_mean_adj(k_a2, N3, N2),   # block 2 (final SAGEConv)
    ]

    params = [
        {   # SPSAGEConv(in_feats -> n_hidden, 'mean')
            "w_self": init_linear(k_w0s, in_feats, n_hidden),
            "w_neigh": init_linear(k_w0n, in_feats, n_hidden),
            "b": jax.random.normal(k_b0, (1, n_hidden), jnp.float32) * 0.1,
        },
        {   # dglnn.SAGEConv(n_hidden -> n_classes, 'mean')
            "w_self": init_linear(k_w1s, n_hidden, n_classes),
            "w_neigh": init_linear(k_w1n, n_hidden, n_classes),
            "b": jax.random.normal(k_b1, (1, n_classes), jnp.float32) * 0.1,
        },
    ]

    # one-time prep (no per-forward cast / pad round trips)
    prepped = prepare_params(params)
    x_bf = prepare_features(input_feats)

    out = spsage_forward(adjs, x_bf, prepped)
    out = jax.block_until_ready(out)
    assert out.shape == (N3, n_classes), out.shape
    assert bool(jnp.all(jnp.isfinite(out)))

    # correctness vs f32 reference (loose tolerance for bf16 matmul operands)
    ref = spsage_reference(adjs, input_feats, params)
    max_err = float(jnp.max(jnp.abs(out - ref)))
    assert max_err < 0.1, f"max abs error vs f32 reference: {max_err}"

    print("KERNEL_OK")
</pallas_src>

<mosaic_0001>
module attributes {stable_mosaic.version = 11 : i64} {
  func.func @kernel(%arg0: i32, %arg1: memref<256x512xbf16, #tpu.memory_space<vmem>>, %arg2: memref<128x256xbf16, #tpu.memory_space<vmem>>, %arg3: memref<64x128xbf16, #tpu.memory_space<vmem>>, %arg4: memref<512x128xbf16, #tpu.memory_space<vmem>>, %arg5: memref<128x128xbf16, #tpu.memory_space<vmem>>, %arg6: memref<128x128xbf16, #tpu.memory_space<vmem>>, %arg7: memref<128x128xbf16, #tpu.memory_space<vmem>>, %arg8: memref<128x128xbf16, #tpu.memory_space<vmem>>, %arg9: memref<1x128xf32, #tpu.memory_space<vmem>>, %arg10: memref<1x128xf32, #tpu.memory_space<vmem>>, %arg11: memref<64x128xf32, #tpu.memory_space<vmem>>) attributes {dimension_semantics = [#tpu.dimension_semantics<arbitrary>], iteration_bounds = array<i64: 1>, scalar_prefetch = 0 : i64, scratch_operands = 0 : i64, tpu.core_type = #tpu.core_type<tc>, window_params = [{pipeline_mode = #tpu.pipeline_mode<synchronous>, transform_indices = @transform_0, window_bounds = array<i64: 256, 512>}, {pipeline_mode = #tpu.pipeline_mode<synchronous>, transform_indices = @transform_1, window_bounds = array<i64: 128, 256>}, {pipeline_mode = #tpu.pipeline_mode<synchronous>, transform_indices = @transform_2, window_bounds = array<i64: 64, 128>}, {pipeline_mode = #tpu.pipeline_mode<synchronous>, transform_indices = @transform_3, window_bounds = array<i64: 512, 128>}, {pipeline_mode = #tpu.pipeline_mode<synchronous>, transform_indices = @transform_4, window_bounds = array<i64: 128, 128>}, {pipeline_mode = #tpu.pipeline_mode<synchronous>, transform_indices = @transform_5, window_bounds = array<i64: 128, 128>}, {pipeline_mode = #tpu.pipeline_mode<synchronous>, transform_indices = @transform_6, window_bounds = array<i64: 128, 128>}, {pipeline_mode = #tpu.pipeline_mode<synchronous>, transform_indices = @transform_7, window_bounds = array<i64: 128, 128>}, {pipeline_mode = #tpu.pipeline_mode<synchronous>, transform_indices = @transform_8, window_bounds = array<i64: 1, 128>}, {pipeline_mode = #tpu.pipeline_mode<synchronous>, transform_indices = @transform_9, window_bounds = array<i64: 1, 128>}, {pipeline_mode = #tpu.pipeline_mode<synchronous>, transform_indices = @transform_10, window_bounds = array<i64: 64, 128>}]} {
    %c0 = arith.constant 0 : index
    %c0_0 = arith.constant 0 : index
    %0 = vector.load %arg4[%c0, %c0_0] : memref<512x128xbf16, #tpu.memory_space<vmem>>, vector<512x128xbf16>
    %c0_1 = arith.constant 0 : index
    %c0_2 = arith.constant 0 : index
    %1 = vector.load %arg1[%c0_1, %c0_2] : memref<256x512xbf16, #tpu.memory_space<vmem>>, vector<256x512xbf16>
    %cst = arith.constant dense<0.000000e+00> : vector<256x128xf32>
    %2 = tpu.matmul %1, %0, %cst {dimension_numbers = #tpu.dot_dimension_numbers<[1], [0], [0], [1], [0, 0, 1, 1], [], []>} : vector<256x512xbf16>, vector<512x128xbf16>, vector<256x128xf32> -> vector<256x128xf32>
    %c0_3 = arith.constant 0 : index
    %c0_4 = arith.constant 0 : index
    %3 = vector.load %arg2[%c0_3, %c0_4] : memref<128x256xbf16, #tpu.memory_space<vmem>>, vector<128x256xbf16>
    %4 = arith.truncf %2 : vector<256x128xf32> to vector<256x128xbf16>
    %cst_5 = arith.constant dense<0.000000e+00> : vector<128x128xf32>
    %5 = tpu.matmul %3, %4, %cst_5 {dimension_numbers = #tpu.dot_dimension_numbers<[1], [0], [0], [1], [0, 0, 1, 1], [], []>} : vector<128x256xbf16>, vector<256x128xbf16>, vector<128x128xf32> -> vector<128x128xf32>
    %6 = vector.extract_strided_slice %0 {offsets = [0, 0], sizes = [128, 128], strides = [1, 1]} : vector<512x128xbf16> to vector<128x128xbf16>
    %c0_6 = arith.constant 0 : index
    %c0_7 = arith.constant 0 : index
    %7 = vector.load %arg5[%c0_6, %c0_7] : memref<128x128xbf16, #tpu.memory_space<vmem>>, vector<128x128xbf16>
    %cst_8 = arith.constant dense<0.000000e+00> : vector<128x128xf32>
    %8 = tpu.matmul %6, %7, %cst_8 {dimension_numbers = #tpu.dot_dimension_numbers<[1], [0], [0], [1], [0, 0, 1, 1], [], []>} : vector<128x128xbf16>, vector<128x128xbf16>, vector<128x128xf32> -> vector<128x128xf32>
    %9 = arith.truncf %5 : vector<128x128xf32> to vector<128x128xbf16>
    %c0_9 = arith.constant 0 : index
    %c0_10 = arith.constant 0 : index
    %10 = vector.load %arg7[%c0_9, %c0_10] : memref<128x128xbf16, #tpu.memory_space<vmem>>, vector<128x128xbf16>
    %cst_11 = arith.constant dense<0.000000e+00> : vector<128x128xf32>
    %11 = tpu.matmul %9, %10, %cst_11 {dimension_numbers = #tpu.dot_dimension_numbers<[1], [0], [0], [1], [0, 0, 1, 1], [], []>} : vector<128x128xbf16>, vector<128x128xbf16>, vector<128x128xf32> -> vector<128x128xf32>
    %12 = arith.addf %8, %11 : vector<128x128xf32>
    %c0_12 = arith.constant 0 : index
    %c0_13 = arith.constant 0 : index
    %13 = vector.load %arg9[%c0_12, %c0_13] : memref<1x128xf32, #tpu.memory_space<vmem>>, vector<1x128xf32>
    %14 = vector.broadcast %13 : vector<1x128xf32> to vector<128x128xf32>
    %15 = arith.addf %12, %14 : vector<128x128xf32>
    %cst_14 = arith.constant 0.000000e+00 : f32
    %16 = vector.broadcast %cst_14 : f32 to vector<128x128xf32>
    %17 = arith.maximumf %15, %16 : vector<128x128xf32>
    %18 = arith.truncf %17 : vector<128x128xf32> to vector<128x128xbf16>
    %c0_15 = arith.constant 0 : index
    %c0_16 = arith.constant 0 : index
    %19 = vector.load %arg3[%c0_15, %c0_16] : memref<64x128xbf16, #tpu.memory_space<vmem>>, vector<64x128xbf16>
    %cst_17 = arith.constant dense<0.000000e+00> : vector<64x128xf32>
    %20 = tpu.matmul %19, %18, %cst_17 {dimension_numbers = #tpu.dot_dimension_numbers<[1], [0], [0], [1], [0, 0, 1, 1], [], []>} : vector<64x128xbf16>, vector<128x128xbf16>, vector<64x128xf32> -> vector<64x128xf32>
    %21 = vector.extract_strided_slice %18 {offsets = [0, 0], sizes = [64, 128], strides = [1, 1]} : vector<128x128xbf16> to vector<64x128xbf16>
    %c0_18 = arith.constant 0 : index
    %c0_19 = arith.constant 0 : index
    %22 = vector.load %arg6[%c0_18, %c0_19] : memref<128x128xbf16, #tpu.memory_space<vmem>>, vector<128x128xbf16>
    %cst_20 = arith.constant dense<0.000000e+00> : vector<64x128xf32>
    %23 = tpu.matmul %21, %22, %cst_20 {dimension_numbers = #tpu.dot_dimension_numbers<[1], [0], [0], [1], [0, 0, 1, 1], [], []>} : vector<64x128xbf16>, vector<128x128xbf16>, vector<64x128xf32> -> vector<64x128xf32>
    %24 = arith.truncf %20 : vector<64x128xf32> to vector<64x128xbf16>
    %c0_21 = arith.constant 0 : index
    %c0_22 = arith.constant 0 : index
    %25 = vector.load %arg8[%c0_21, %c0_22] : memref<128x128xbf16, #tpu.memory_space<vmem>>, vector<128x128xbf16>
    %cst_23 = arith.constant dense<0.000000e+00> : vector<64x128xf32>
    %26 = tpu.matmul %24, %25, %cst_23 {dimension_numbers = #tpu.dot_dimension_numbers<[1], [0], [0], [1], [0, 0, 1, 1], [], []>} : vector<64x128xbf16>, vector<128x128xbf16>, vector<64x128xf32> -> vector<64x128xf32>
    %27 = arith.addf %23, %26 : vector<64x128xf32>
    %c0_24 = arith.constant 0 : index
    %c0_25 = arith.constant 0 : index
    %28 = vector.load %arg10[%c0_24, %c0_25] : memref<1x128xf32, #tpu.memory_space<vmem>>, vector<1x128xf32>
    %29 = vector.broadcast %28 : vector<1x128xf32> to vector<64x128xf32>
    %30 = arith.addf %27, %29 : vector<64x128xf32>
    %c0_26 = arith.constant 0 : index
    %c0_27 = arith.constant 0 : index
    %31 = vector.load %arg11[%c0_26, %c0_27] : memref<64x128xf32, #tpu.memory_space<vmem>>, vector<64x128xf32>
    tpu.vector_store %arg11[%c0_26, %c0_27], %30 {strides = array<i32>} : memref<64x128xf32, #tpu.memory_space<vmem>>, vector<64x128xf32>,
    return
  }
  func.func @transform_0(%arg0: i32) -> (i32, i32) {
    %c0_i32 = arith.constant 0 : i32
    %c0_i32_0 = arith.constant 0 : i32
    %c0_i32_1 = arith.constant 0 : i32
    return %c0_i32, %c0_i32_0 : i32, i32
  }
  func.func @transform_1(%arg0: i32) -> (i32, i32) {
    %c0_i32 = arith.constant 0 : i32
    %c0_i32_0 = arith.constant 0 : i32
    %c0_i32_1 = arith.constant 0 : i32
    return %c0_i32, %c0_i32_0 : i32, i32
  }
  func.func @transform_2(%arg0: i32) -> (i32, i32) {
    %c0_i32 = arith.constant 0 : i32
    %c0_i32_0 = arith.constant 0 : i32
    %c0_i32_1 = arith.constant 0 : i32
    return %c0_i32, %c0_i32_0 : i32, i32
  }
  func.func @transform_3(%arg0: i32) -> (i32, i32) {
    %c0_i32 = arith.constant 0 : i32
    %c0_i32_0 = arith.constant 0 : i32
    %c0_i32_1 = arith.constant 0 : i32
    return %c0_i32, %c0_i32_0 : i32, i32
  }
  func.func @transform_4(%arg0: i32) -> (i32, i32) {
    %c0_i32 = arith.constant 0 : i32
    %c0_i32_0 = arith.constant 0 : i32
    %c0_i32_1 = arith.constant 0 : i32
    return %c0_i32, %c0_i32_0 : i32, i32
  }
  func.func @transform_5(%arg0: i32) -> (i32, i32) {
    %c0_i32 = arith.constant 0 : i32
    %c0_i32_0 = arith.constant 0 : i32
    %c0_i32_1 = arith.constant 0 : i32
    return %c0_i32, %c0_i32_0 : i32, i32
  }
  func.func @transform_6(%arg0: i32) -> (i32, i32) {
    %c0_i32 = arith.constant 0 : i32
    %c0_i32_0 = arith.constant 0 : i32
    %c0_i32_1 = arith.constant 0 : i32
    return %c0_i32, %c0_i32_0 : i32, i32
  }
  func.func @transform_7(%arg0: i32) -> (i32, i32) {
    %c0_i32 = arith.constant 0 : i32
    %c0_i32_0 = arith.constant 0 : i32
    %c0_i32_1 = arith.constant 0 : i32
    return %c0_i32, %c0_i32_0 : i32, i32
  }
  func.func @transform_8(%arg0: i32) -> (i32, i32) {
    %c0_i32 = arith.constant 0 : i32
    %c0_i32_0 = arith.constant 0 : i32
    %c0_i32_1 = arith.constant 0 : i32
    return %c0_i32, %c0_i32_0 : i32, i32
  }
  func.func @transform_9(%arg0: i32) -> (i32, i32) {
    %c0_i32 = arith.constant 0 : i32
    %c0_i32_0 = arith.constant 0 : i32
    %c0_i32_1 = arith.constant 0 : i32
    return %c0_i32, %c0_i32_0 : i32, i32
  }
  func.func @transform_10(%arg0: i32) -> (i32, i32) {
    %c0_i32 = arith.constant 0 : i32
    %c0_i32_0 = arith.constant 0 : i32
    %c0_i32_1 = arith.constant 0 : i32
    return %c0_i32, %c0_i32_0 : i32, i32
  }
}

</mosaic_0001>

<llo_original>
// kernel: tpu_custom_call.1
$region0: #{tpu_custom_call.1}
  #allocation0 [shape = 'u32[]', space=smem, size = 0x4, offset = 0x4, fixed_abs, tag = 'smem constant byte address 0x4 - core index']
  #allocation1 [shape = 'u32[144,128]{1,0:T(1,128)}', space=vmem, size = 0x12000, scoped, tag = 'internal scratch']
  %s0 = inlined_call_operand.hbm [shape: bf16[256,512], index: 0, kind: input, shape index: {}]
  %s1 = inlined_call_operand.hbm [shape: bf16[128,256], index: 1, kind: input, shape index: {}]
  %s2 = inlined_call_operand.hbm [shape: bf16[64,128], index: 2, kind: input, shape index: {}]
  %s3 = inlined_call_operand.hbm [shape: bf16[512,128], index: 3, kind: input, shape index: {}]
  %s4 = inlined_call_operand.hbm [shape: bf16[128,128], index: 4, kind: input, shape index: {}]
  %s5 = inlined_call_operand.hbm [shape: bf16[128,128], index: 5, kind: input, shape index: {}]
  %s6 = inlined_call_operand.hbm [shape: bf16[128,128], index: 6, kind: input, shape index: {}]
  %s7 = inlined_call_operand.hbm [shape: bf16[128,128], index: 7, kind: input, shape index: {}]
  %s8 = inlined_call_operand.vmem [shape: f32[1,128], index: 8, kind: input, shape index: {}]
  %s9 = inlined_call_operand.vmem [shape: f32[1,128], index: 9, kind: input, shape index: {}]
  %s10 = inlined_call_operand.hbm [shape: f32[64,128], index: 10, kind: output, shape index: {}]
  %s11 = sld [smem:[#allocation0]]
  $region82: #{tpu_custom_call.1} parent=0
    _
  %s13 = ssub.s32 1, %s11
  %s14 = scalar_select 0, %s13, %s11
  $region1: #{tpu_custom_call.1} parent=0
    #allocation2 [shape = 'u8[262144]{0}', space=vmem, size = 0x40000, scoped, tag = 'input window, operand 0, single buffered']
    #allocation3 [shape = 's32[1]{0}', space=sflag, size = 0x4, scoped, tag = 'scoped memory for tpu_custom_call.1']
    #allocation4 [shape = 's32[1]{0}', space=sflag, size = 0x4, scoped, tag = 'scoped memory for tpu_custom_call.1']
    #allocation5 [shape = 'u8[65536]{0}', space=vmem, size = 0x10000, scoped, tag = 'input window, operand 1, single buffered']
    #allocation6 [shape = 's32[1]{0}', space=sflag, size = 0x4, scoped, tag = 'scoped memory for tpu_custom_call.1']
    #allocation7 [shape = 'u8[16384]{0}', space=vmem, size = 0x4000, scoped, tag = 'input window, operand 2, single buffered']
    #allocation8 [shape = 'u8[131072]{0}', space=vmem, size = 0x20000, scoped, tag = 'input window, operand 3, single buffered']
    #allocation9 [shape = 's32[1]{0}', space=sflag, size = 0x4, scoped, tag = 'scoped memory for tpu_custom_call.1']
    #allocation10 [shape = 'u8[32768]{0}', space=vmem, size = 0x8000, scoped, tag = 'input window, operand 4, single buffered']
    #allocation11 [shape = 'u8[32768]{0}', space=vmem, size = 0x8000, scoped, tag = 'input window, operand 5, single buffered']
    #allocation12 [shape = 's32[1]{0}', space=sflag, size = 0x4, scoped, tag = 'scoped memory for tpu_custom_call.1']
    #allocation13 [shape = 'u8[32768]{0}', space=vmem, size = 0x8000, scoped, tag = 'input window, operand 6, single buffered']
    #allocation14 [shape = 'u8[32768]{0}', space=vmem, size = 0x8000, scoped, tag = 'input window, operand 7, single buffered']
    #allocation15 [shape = 's32[1]{0}', space=sflag, size = 0x4, scoped, tag = 'scoped memory for tpu_custom_call.1']
    #allocation16 [shape = 'u8[32768]{0}', space=vmem, size = 0x8000, scoped, tag = 'output window, operand 0, single buffered']
    %15 = vsyncpa [#allocation3], 0
    %16 = vsyncpa [#allocation6], 0
    %17 = vsyncpa [#allocation9], 0
    %18 = vsyncpa [#allocation12], 0
    %19 = vsyncpa [#allocation15], 0
    %20 = vsyncpa [#allocation4], 0
    // Predicated region
    $region2: #{tpu_custom_call.1} parent=1 // pred_check
      _
    $region3: #{tpu_custom_call.1} parent=1 // pred_check_branch
      %22 = sbr.rel (0) target = $region5
    $region4: #{tpu_custom_call.1} parent=1 // pred_region
      %s24 = ssub.s32 8192, 8192
      %25 = vsyncadd [#allocation3], %s24
      %s26 = sshll.u32 [#allocation2], 4
      %s27 = int_to_ptr.vmem [resolvable:$true] %s26
      %32 = dma.hbm_to_vmem [thread:$0]  %s0, 8192, %s27, [#allocation3], 256, 256, 16
    $region5: #{tpu_custom_call.1} parent=1 // pred_fallthru
      _
    // Predicated region
    $region6: #{tpu_custom_call.1} parent=1 // pred_check
      _
    $region7: #{tpu_custom_call.1} parent=1 // pred_check_branch
      %34 = sbr.rel (0) target = $region9
    $region8: #{tpu_custom_call.1} parent=1 // pred_region
      %s36 = ssub.s32 2048, 2048
      %37 = vsyncadd [#allocation6], %s36
      %s38 = sshll.u32 [#allocation5], 4
      %s39 = int_to_ptr.vmem [resolvable:$true] %s38
      %44 = dma.hbm_to_vmem [thread:$0]  %s1, 2048, %s39, [#allocation6], 128, 128, 8
    $region9: #{tpu_custom_call.1} parent=1 // pred_fallthru
      _
    // Predicated region
    $region10: #{tpu_custom_call.1} parent=1 // pred_check
      _
    $region11: #{tpu_custom_call.1} parent=1 // pred_check_branch
      %46 = sbr.rel (0) target = $region13
    $region12: #{tpu_custom_call.1} parent=1 // pred_region
      %s48 = ssub.s32 512, 512
      %49 = vsyncadd [#allocation6], %s48
      %s50 = sshll.u32 [#allocation7], 4
      %s51 = int_to_ptr.vmem [resolvable:$true] %s50
      %56 = dma.hbm_to_vmem [thread:$0]  %s2, 512, %s51, [#allocation6], 64, 64, 4
    $region13: #{tpu_custom_call.1} parent=1 // pred_fallthru
      _
    // Predicated region
    $region14: #{tpu_custom_call.1} parent=1 // pred_check
      _
    $region15: #{tpu_custom_call.1} parent=1 // pred_check_branch
      %58 = sbr.rel (0) target = $region17
    $region16: #{tpu_custom_call.1} parent=1 // pred_region
      %s60 = ssub.s32 4096, 4096
      %61 = vsyncadd [#allocation9], %s60
      %s62 = sshll.u32 [#allocation8], 4
      %s63 = int_to_ptr.vmem [resolvable:$true] %s62
      %68 = dma.hbm_to_vmem [thread:$0]  %s3, 4096, %s63, [#allocation9], 64, 64, 4
    $region17: #{tpu_custom_call.1} parent=1 // pred_fallthru
      _
    // Predicated region
    $region18: #{tpu_custom_call.1} parent=1 // pred_check
      _
    $region19: #{tpu_custom_call.1} parent=1 // pred_check_branch
      %70 = sbr.rel (0) target = $region21
    $region20: #{tpu_custom_call.1} parent=1 // pred_region
      %s72 = ssub.s32 1024, 1024
      %73 = vsyncadd [#allocation9], %s72
      %s74 = sshll.u32 [#allocation10], 4
      %s75 = int_to_ptr.vmem [resolvable:$true] %s74
      %80 = dma.hbm_to_vmem [thread:$0]  %s4, 1024, %s75, [#allocation9], 64, 64, 4
    $region21: #{tpu_custom_call.1} parent=1 // pred_fallthru
      _
    // Predicated region
    $region22: #{tpu_custom_call.1} parent=1 // pred_check
      _
    $region23: #{tpu_custom_call.1} parent=1 // pred_check_branch
      %82 = sbr.rel (0) target = $region25
    $region24: #{tpu_custom_call.1} parent=1 // pred_region
      %s84 = ssub.s32 1024, 1024
      %85 = vsyncadd [#allocation12], %s84
      %s86 = sshll.u32 [#allocation11], 4
      %s87 = int_to_ptr.vmem [resolvable:$true] %s86
      %92 = dma.hbm_to_vmem [thread:$0]  %s5, 1024, %s87, [#allocation12], 64, 64, 4
    $region25: #{tpu_custom_call.1} parent=1 // pred_fallthru
      _
    // Predicated region
    $region26: #{tpu_custom_call.1} parent=1 // pred_check
      _
    $region27: #{tpu_custom_call.1} parent=1 // pred_check_branch
      %94 = sbr.rel (0) target = $region29
    $region28: #{tpu_custom_call.1} parent=1 // pred_region
      %s96 = ssub.s32 1024, 1024
      %97 = vsyncadd [#allocation12], %s96
      %s98 = sshll.u32 [#allocation13], 4
      %s99 = int_to_ptr.vmem [resolvable:$true] %s98
      %104 = dma.hbm_to_vmem [thread:$0]  %s6, 1024, %s99, [#allocation12], 64, 64, 4
    $region29: #{tpu_custom_call.1} parent=1 // pred_fallthru
      _
    // Predicated region
    $region30: #{tpu_custom_call.1} parent=1 // pred_check
      _
    $region31: #{tpu_custom_call.1} parent=1 // pred_check_branch
      %106 = sbr.rel (0) target = $region33
    $region32: #{tpu_custom_call.1} parent=1 // pred_region
      %s108 = ssub.s32 1024, 1024
      %109 = vsyncadd [#allocation15], %s108
      %s110 = sshll.u32 [#allocation14], 4
      %s111 = int_to_ptr.vmem [resolvable:$true] %s110
      %116 = dma.hbm_to_vmem [thread:$0]  %s7, 1024, %s111, [#allocation15], 64, 64, 4
    $region33: #{tpu_custom_call.1} parent=1 // pred_fallthru
      _
    // Predicated region
    $region34: #{tpu_custom_call.1} parent=1 // pred_check
      _
    $region35: #{tpu_custom_call.1} parent=1 // pred_check_branch
      %118 = sbr.rel (0) target = $region37
    $region36: #{tpu_custom_call.1} parent=1 // pred_region
      _
    $region37: #{tpu_custom_call.1} parent=1 // pred_fallthru
      _
    // Predicated region
    $region38: #{tpu_custom_call.1} parent=1 // pred_check
      _
    $region39: #{tpu_custom_call.1} parent=1 // pred_check_branch
      %120 = sbr.rel (0) target = $region41
    $region40: #{tpu_custom_call.1} parent=1 // pred_region
      _
    $region41: #{tpu_custom_call.1} parent=1 // pred_fallthru
      _
    // Predicated region
    $region42: #{tpu_custom_call.1} parent=1 // pred_check
      _
    $region43: #{tpu_custom_call.1} parent=1 // pred_check_branch
      %122 = sbr.rel (0) target = $region45
    $region44: #{tpu_custom_call.1} parent=1 // pred_region
      %123 = dma.done [#allocation3], 8192
    $region45: #{tpu_custom_call.1} parent=1 // pred_fallthru
      _
    // Predicated region
    $region46: #{tpu_custom_call.1} parent=1 // pred_check
      _
    $region47: #{tpu_custom_call.1} parent=1 // pred_check_branch
      %125 = sbr.rel (0) target = $region49
    $region48: #{tpu_custom_call.1} parent=1 // pred_region
      %126 = dma.done [#allocation6], 2048
    $region49: #{tpu_custom_call.1} parent=1 // pred_fallthru
      _
    // Predicated region
    $region50: #{tpu_custom_call.1} parent=1 // pred_check
      _
    $region51: #{tpu_custom_call.1} parent=1 // pred_check_branch
      %128 = sbr.rel (0) target = $region53
    $region52: #{tpu_custom_call.1} parent=1 // pred_region
      %129 = dma.done [#allocation6], 512
    $region53: #{tpu_custom_call.1} parent=1 // pred_fallthru
      _
    // Predicated region
    $region54: #{tpu_custom_call.1} parent=1 // pred_check
      _
    $region55: #{tpu_custom_call.1} parent=1 // pred_check_branch
      %131 = sbr.rel (0) target = $region57
    $region56: #{tpu_custom_call.1} parent=1 // pred_region
      %132 = dma.done [#allocation9], 4096
    $region57: #{tpu_custom_call.1} parent=1 // pred_fallthru
      _
    // Predicated region
    $region58: #{tpu_custom_call.1} parent=1 // pred_check
      _
    $region59: #{tpu_custom_call.1} parent=1 // pred_check_branch
      %134 = sbr.rel (0) target = $region61
    $region60: #{tpu_custom_call.1} parent=1 // pred_region
      %135 = dma.done [#allocation9], 1024
    $region61: #{tpu_custom_call.1} parent=1 // pred_fallthru
      _
    // Predicated region
    $region62: #{tpu_custom_call.1} parent=1 // pred_check
      _
    $region63: #{tpu_custom_call.1} parent=1 // pred_check_branch
      %137 = sbr.rel (0) target = $region65
    $region64: #{tpu_custom_call.1} parent=1 // pred_region
      %138 = dma.done [#allocation12], 1024
    $region65: #{tpu_custom_call.1} parent=1 // pred_fallthru
      _
    // Predicated region
    $region66: #{tpu_custom_call.1} parent=1 // pred_check
      _
    $region67: #{tpu_custom_call.1} parent=1 // pred_check_branch
      %140 = sbr.rel (0) target = $region69
    $region68: #{tpu_custom_call.1} parent=1 // pred_region
      %141 = dma.done [#allocation12], 1024
    $region69: #{tpu_custom_call.1} parent=1 // pred_fallthru
      _
    // Predicated region
    $region70: #{tpu_custom_call.1} parent=1 // pred_check
      _
    $region71: #{tpu_custom_call.1} parent=1 // pred_check_branch
      %143 = sbr.rel (0) target = $region73
    $region72: #{tpu_custom_call.1} parent=1 // pred_region
      %144 = dma.done [#allocation15], 1024
    $region73: #{tpu_custom_call.1} parent=1 // pred_fallthru
      _
    %v146 = vld [vmem:[#allocation8] sm:$0xf]
    %v147 = vld [vmem:[#allocation8 + $0x4] sm:$0xf]
    %v148 = vld [vmem:[#allocation8 + $0x8] sm:$0xf]
    %v149 = vld [vmem:[#allocation8 + $0xc] sm:$0xf]
    %v150 = vld [vmem:[#allocation8 + $0x10] sm:$0xf]
    %v151 = vld [vmem:[#allocation8 + $0x14] sm:$0xf]
    %v152 = vld [vmem:[#allocation8 + $0x18] sm:$0xf]
    %v153 = vld [vmem:[#allocation8 + $0x1c] sm:$0xf]
    %v154 = vld [vmem:[#allocation8 + $0x20] sm:$0xf]
    %v155 = vld [vmem:[#allocation8 + $0x24] sm:$0xf]
    %v156 = vld [vmem:[#allocation8 + $0x28] sm:$0xf]
    %v157 = vld [vmem:[#allocation8 + $0x2c] sm:$0xf]
    %v158 = vld [vmem:[#allocation8 + $0x30] sm:$0xf]
    %v159 = vld [vmem:[#allocation8 + $0x34] sm:$0xf]
    %v160 = vld [vmem:[#allocation8 + $0x38] sm:$0xf]
    %v161 = vld [vmem:[#allocation8 + $0x3c] sm:$0xf]
    %v162 = vld [vmem:[#allocation8 + $0x40] sm:$0xf]
    %v163 = vld [vmem:[#allocation8 + $0x44] sm:$0xf]
    %v164 = vld [vmem:[#allocation8 + $0x48] sm:$0xf]
    %v165 = vld [vmem:[#allocation8 + $0x4c] sm:$0xf]
    %v166 = vld [vmem:[#allocation8 + $0x50] sm:$0xf]
    %v167 = vld [vmem:[#allocation8 + $0x54] sm:$0xf]
    %v168 = vld [vmem:[#allocation8 + $0x58] sm:$0xf]
    %v169 = vld [vmem:[#allocation8 + $0x5c] sm:$0xf]
    %v170 = vld [vmem:[#allocation8 + $0x60] sm:$0xf]
    %v171 = vld [vmem:[#allocation8 + $0x64] sm:$0xf]
    %v172 = vld [vmem:[#allocation8 + $0x68] sm:$0xf]
    %v173 = vld [vmem:[#allocation8 + $0x6c] sm:$0xf]
    %v174 = vld [vmem:[#allocation8 + $0x70] sm:$0xf]
    %v175 = vld [vmem:[#allocation8 + $0x74] sm:$0xf]
    %v176 = vld [vmem:[#allocation8 + $0x78] sm:$0xf]
    %v177 = vld [vmem:[#allocation8 + $0x7c] sm:$0xf]
    %v178 = vld [vmem:[#allocation8 + $0x80] sm:$0xf]
    %v179 = vld [vmem:[#allocation8 + $0x84] sm:$0xf]
    %v180 = vld [vmem:[#allocation8 + $0x88] sm:$0xf]
    %v181 = vld [vmem:[#allocation8 + $0x8c] sm:$0xf]
    %v182 = vld [vmem:[#allocation8 + $0x90] sm:$0xf]
    %v183 = vld [vmem:[#allocation8 + $0x94] sm:$0xf]
    %v184 = vld [vmem:[#allocation8 + $0x98] sm:$0xf]
    %v185 = vld [vmem:[#allocation8 + $0x9c] sm:$0xf]
    %v186 = vld [vmem:[#allocation8 + $0xa0] sm:$0xf]
    %v187 = vld [vmem:[#allocation8 + $0xa4] sm:$0xf]
    %v188 = vld [vmem:[#allocation8 + $0xa8] sm:$0xf]
    %v189 = vld [vmem:[#allocation8 + $0xac] sm:$0xf]
    %v190 = vld [vmem:[#allocation8 + $0xb0] sm:$0xf]
    %v191 = vld [vmem:[#allocation8 + $0xb4] sm:$0xf]
    %v192 = vld [vmem:[#allocation8 + $0xb8] sm:$0xf]
    %v193 = vld [vmem:[#allocation8 + $0xbc] sm:$0xf]
    %v194 = vld [vmem:[#allocation8 + $0xc0] sm:$0xf]
    %v195 = vld [vmem:[#allocation8 + $0xc4] sm:$0xf]
    %v196 = vld [vmem:[#allocation8 + $0xc8] sm:$0xf]
    %v197 = vld [vmem:[#allocation8 + $0xcc] sm:$0xf]
    %v198 = vld [vmem:[#allocation8 + $0xd0] sm:$0xf]
    %v199 = vld [vmem:[#allocation8 + $0xd4] sm:$0xf]
    %v200 = vld [vmem:[#allocation8 + $0xd8] sm:$0xf]
    %v201 = vld [vmem:[#allocation8 + $0xdc] sm:$0xf]
    %v202 = vld [vmem:[#allocation8 + $0xe0] sm:$0xf]
    %v203 = vld [vmem:[#allocation8 + $0xe4] sm:$0xf]
    %v204 = vld [vmem:[#allocation8 + $0xe8] sm:$0xf]
    %v205 = vld [vmem:[#allocation8 + $0xec] sm:$0xf]
    %v206 = vld [vmem:[#allocation8 + $0xf0] sm:$0xf]
    %v207 = vld [vmem:[#allocation8 + $0xf4] sm:$0xf]
    %v208 = vld [vmem:[#allocation8 + $0xf8] sm:$0xf]
    %v209 = vld [vmem:[#allocation8 + $0xfc] sm:$0xf]
    %v210 = vld [vmem:[#allocation2] sm:$0xff]
    %v211 = vld [vmem:[#allocation2 + $0x8] sm:$0xff]
    %v212 = vld [vmem:[#allocation2 + $0x10] sm:$0xff]
    %v213 = vld [vmem:[#allocation2 + $0x18] sm:$0xff]
    %v214 = vld [vmem:[#allocation2 + $0x20] sm:$0xff]
    %v215 = vld [vmem:[#allocation2 + $0x28] sm:$0xff]
    %v216 = vld [vmem:[#allocation2 + $0x30] sm:$0xff]
    %v217 = vld [vmem:[#allocation2 + $0x38] sm:$0xff]
    %v218 = vld [vmem:[#allocation2 + $0x40] sm:$0xff]
    %v219 = vld [vmem:[#allocation2 + $0x48] sm:$0xff]
    %v220 = vld [vmem:[#allocation2 + $0x50] sm:$0xff]
    %v221 = vld [vmem:[#allocation2 + $0x58] sm:$0xff]
    %v222 = vld [vmem:[#allocation2 + $0x60] sm:$0xff]
    %v223 = vld [vmem:[#allocation2 + $0x68] sm:$0xff]
    %v224 = vld [vmem:[#allocation2 + $0x70] sm:$0xff]
    %v225 = vld [vmem:[#allocation2 + $0x78] sm:$0xff]
    %v226 = vld [vmem:[#allocation2 + $0x80] sm:$0xff]
    %v227 = vld [vmem:[#allocation2 + $0x88] sm:$0xff]
    %v228 = vld [vmem:[#allocation2 + $0x90] sm:$0xff]
    %v229 = vld [vmem:[#allocation2 + $0x98] sm:$0xff]
    %v230 = vld [vmem:[#allocation2 + $0xa0] sm:$0xff]
    %v231 = vld [vmem:[#allocation2 + $0xa8] sm:$0xff]
    %v232 = vld [vmem:[#allocation2 + $0xb0] sm:$0xff]
    %v233 = vld [vmem:[#allocation2 + $0xb8] sm:$0xff]
    %v234 = vld [vmem:[#allocation2 + $0xc0] sm:$0xff]
    %v235 = vld [vmem:[#allocation2 + $0xc8] sm:$0xff]
    %v236 = vld [vmem:[#allocation2 + $0xd0] sm:$0xff]
    %v237 = vld [vmem:[#allocation2 + $0xd8] sm:$0xff]
    %v238 = vld [vmem:[#allocation2 + $0xe0] sm:$0xff]
    %v239 = vld [vmem:[#allocation2 + $0xe8] sm:$0xff]
    %v240 = vld [vmem:[#allocation2 + $0xf0] sm:$0xff]
    %v241 = vld [vmem:[#allocation2 + $0xf8] sm:$0xff]
    %v242 = vld [vmem:[#allocation2 + $0x100] sm:$0xff]
    %v243 = vld [vmem:[#allocation2 + $0x108] sm:$0xff]
    %v244 = vld [vmem:[#allocation2 + $0x110] sm:$0xff]
    %v245 = vld [vmem:[#allocation2 + $0x118] sm:$0xff]
    %v246 = vld [vmem:[#allocation2 + $0x120] sm:$0xff]
    %v247 = vld [vmem:[#allocation2 + $0x128] sm:$0xff]
    %v248 = vld [vmem:[#allocation2 + $0x130] sm:$0xff]
    %v249 = vld [vmem:[#allocation2 + $0x138] sm:$0xff]
    %v250 = vld [vmem:[#allocation2 + $0x140] sm:$0xff]
    %v251 = vld [vmem:[#allocation2 + $0x148] sm:$0xff]
    %v252 = vld [vmem:[#allocation2 + $0x150] sm:$0xff]
    %v253 = vld [vmem:[#allocation2 + $0x158] sm:$0xff]
    %v254 = vld [vmem:[#allocation2 + $0x160] sm:$0xff]
    %v255 = vld [vmem:[#allocation2 + $0x168] sm:$0xff]
    %v256 = vld [vmem:[#allocation2 + $0x170] sm:$0xff]
    %v257 = vld [vmem:[#allocation2 + $0x178] sm:$0xff]
    %v258 = vld [vmem:[#allocation2 + $0x180] sm:$0xff]
    %v259 = vld [vmem:[#allocation2 + $0x188] sm:$0xff]
    %v260 = vld [vmem:[#allocation2 + $0x190] sm:$0xff]
    %v261 = vld [vmem:[#allocation2 + $0x198] sm:$0xff]
    %v262 = vld [vmem:[#allocation2 + $0x1a0] sm:$0xff]
    %v263 = vld [vmem:[#allocation2 + $0x1a8] sm:$0xff]
    %v264 = vld [vmem:[#allocation2 + $0x1b0] sm:$0xff]
    %v265 = vld [vmem:[#allocation2 + $0x1b8] sm:$0xff]
    %v266 = vld [vmem:[#allocation2 + $0x1c0] sm:$0xff]
    %v267 = vld [vmem:[#allocation2 + $0x1c8] sm:$0xff]
    %v268 = vld [vmem:[#allocation2 + $0x1d0] sm:$0xff]
    %v269 = vld [vmem:[#allocation2 + $0x1d8] sm:$0xff]
    %v270 = vld [vmem:[#allocation2 + $0x1e0] sm:$0xff]
    %v271 = vld [vmem:[#allocation2 + $0x1e8] sm:$0xff]
    %v272 = vld [vmem:[#allocation2 + $0x1f0] sm:$0xff]
    %v273 = vld [vmem:[#allocation2 + $0x1f8] sm:$0xff]
    %v338 = vunpack.c.l.b16 %v210
    %v339 = vunpack.c.h.b16 %v210
    %v340 = vunpack.c.l.b16 %v211
    %v341 = vunpack.c.h.b16 %v211
    %v342 = vunpack.c.l.b16 %v212
    %v343 = vunpack.c.h.b16 %v212
    %v344 = vunpack.c.l.b16 %v213
    %v345 = vunpack.c.h.b16 %v213
    %v346 = vunpack.c.l.b16 %v214
    %v347 = vunpack.c.h.b16 %v214
    %v348 = vunpack.c.l.b16 %v215
    %v349 = vunpack.c.h.b16 %v215
    %v350 = vunpack.c.l.b16 %v216
    %v351 = vunpack.c.h.b16 %v216
    %v352 = vunpack.c.l.b16 %v217
    %v353 = vunpack.c.h.b16 %v217
    %v354 = vunpack.c.l.b16 %v218
    %v355 = vunpack.c.h.b16 %v218
    %v356 = vunpack.c.l.b16 %v219
    %v357 = vunpack.c.h.b16 %v219
    %v358 = vunpack.c.l.b16 %v220
    %v359 = vunpack.c.h.b16 %v220
    %v360 = vunpack.c.l.b16 %v221
    %v361 = vunpack.c.h.b16 %v221
    %v362 = vunpack.c.l.b16 %v222
    %v363 = vunpack.c.h.b16 %v222
    %v364 = vunpack.c.l.b16 %v223
    %v365 = vunpack.c.h.b16 %v223
    %v366 = vunpack.c.l.b16 %v224
    %v367 = vunpack.c.h.b16 %v224
    %v368 = vunpack.c.l.b16 %v225
    %v369 = vunpack.c.h.b16 %v225
    %v370 = vunpack.c.l.b16 %v226
    %v371 = vunpack.c.h.b16 %v226
    %v372 = vunpack.c.l.b16 %v227
    %v373 = vunpack.c.h.b16 %v227
    %v374 = vunpack.c.l.b16 %v228
    %v375 = vunpack.c.h.b16 %v228
    %v376 = vunpack.c.l.b16 %v229
    %v377 = vunpack.c.h.b16 %v229
    %v378 = vunpack.c.l.b16 %v230
    %v379 = vunpack.c.h.b16 %v230
    %v380 = vunpack.c.l.b16 %v231
    %v381 = vunpack.c.h.b16 %v231
    %v382 = vunpack.c.l.b16 %v232
    %v383 = vunpack.c.h.b16 %v232
    %v384 = vunpack.c.l.b16 %v233
    %v385 = vunpack.c.h.b16 %v233
    %v386 = vunpack.c.l.b16 %v234
    %v387 = vunpack.c.h.b16 %v234
    %v388 = vunpack.c.l.b16 %v235
    %v389 = vunpack.c.h.b16 %v235
    %v390 = vunpack.c.l.b16 %v236
    %v391 = vunpack.c.h.b16 %v236
    %v392 = vunpack.c.l.b16 %v237
    %v393 = vunpack.c.h.b16 %v237
    %v394 = vunpack.c.l.b16 %v238
    %v395 = vunpack.c.h.b16 %v238
    %v396 = vunpack.c.l.b16 %v239
    %v397 = vunpack.c.h.b16 %v239
    %v398 = vunpack.c.l.b16 %v240
    %v399 = vunpack.c.h.b16 %v240
    %v400 = vunpack.c.l.b16 %v241
    %v401 = vunpack.c.h.b16 %v241
    %v402 = vunpack.c.l.b16 %v242
    %v403 = vunpack.c.h.b16 %v242
    %v404 = vunpack.c.l.b16 %v243
    %v405 = vunpack.c.h.b16 %v243
    %v406 = vunpack.c.l.b16 %v244
    %v407 = vunpack.c.h.b16 %v244
    %v408 = vunpack.c.l.b16 %v245
    %v409 = vunpack.c.h.b16 %v245
    %v410 = vunpack.c.l.b16 %v246
    %v411 = vunpack.c.h.b16 %v246
    %v412 = vunpack.c.l.b16 %v247
    %v413 = vunpack.c.h.b16 %v247
    %v414 = vunpack.c.l.b16 %v248
    %v415 = vunpack.c.h.b16 %v248
    %v416 = vunpack.c.l.b16 %v249
    %v417 = vunpack.c.h.b16 %v249
    %v418 = vunpack.c.l.b16 %v250
    %v419 = vunpack.c.h.b16 %v250
    %v420 = vunpack.c.l.b16 %v251
    %v421 = vunpack.c.h.b16 %v251
    %v422 = vunpack.c.l.b16 %v252
    %v423 = vunpack.c.h.b16 %v252
    %v424 = vunpack.c.l.b16 %v253
    %v425 = vunpack.c.h.b16 %v253
    %v426 = vunpack.c.l.b16 %v254
    %v427 = vunpack.c.h.b16 %v254
    %v428 = vunpack.c.l.b16 %v255
    %v429 = vunpack.c.h.b16 %v255
    %v430 = vunpack.c.l.b16 %v256
    %v431 = vunpack.c.h.b16 %v256
    %v432 = vunpack.c.l.b16 %v257
    %v433 = vunpack.c.h.b16 %v257
    %v434 = vunpack.c.l.b16 %v258
    %v435 = vunpack.c.h.b16 %v258
    %v436 = vunpack.c.l.b16 %v259
    %v437 = vunpack.c.h.b16 %v259
    %v438 = vunpack.c.l.b16 %v260
    %v439 = vunpack.c.h.b16 %v260
    %v440 = vunpack.c.l.b16 %v261
    %v441 = vunpack.c.h.b16 %v261
    %v442 = vunpack.c.l.b16 %v262
    %v443 = vunpack.c.h.b16 %v262
    %v444 = vunpack.c.l.b16 %v263
    %v445 = vunpack.c.h.b16 %v263
    %v446 = vunpack.c.l.b16 %v264
    %v447 = vunpack.c.h.b16 %v264
    %v448 = vunpack.c.l.b16 %v265
    %v449 = vunpack.c.h.b16 %v265
    %v450 = vunpack.c.l.b16 %v266
    %v451 = vunpack.c.h.b16 %v266
    %v452 = vunpack.c.l.b16 %v267
    %v453 = vunpack.c.h.b16 %v267
    %v454 = vunpack.c.l.b16 %v268
    %v455 = vunpack.c.h.b16 %v268
    %v456 = vunpack.c.l.b16 %v269
    %v457 = vunpack.c.h.b16 %v269
    %v458 = vunpack.c.l.b16 %v270
    %v459 = vunpack.c.h.b16 %v270
    %v460 = vunpack.c.l.b16 %v271
    %v461 = vunpack.c.h.b16 %v271
    %v462 = vunpack.c.l.b16 %v272
    %v463 = vunpack.c.h.b16 %v272
    %v464 = vunpack.c.l.b16 %v273
    %v465 = vunpack.c.h.b16 %v273
    %v466 = vpack.c.b16 %v342, %v338
    %v467 = vpack.c.b16 %v343, %v339
    %v468 = vpack.c.b16 %v344, %v340
    %v469 = vpack.c.b16 %v345, %v341
    %v470 = vpack.c.b16 %v350, %v346
    %v471 = vpack.c.b16 %v351, %v347
    %v472 = vpack.c.b16 %v352, %v348
    %v473 = vpack.c.b16 %v353, %v349
    %v474 = vpack.c.b16 %v358, %v354
    %v475 = vpack.c.b16 %v359, %v355
    %v476 = vpack.c.b16 %v360, %v356
    %v477 = vpack.c.b16 %v361, %v357
    %v478 = vpack.c.b16 %v366, %v362
    %v479 = vpack.c.b16 %v367, %v363
    %v480 = vpack.c.b16 %v368, %v364
    %v481 = vpack.c.b16 %v369, %v365
    %v482 = vpack.c.b16 %v374, %v370
    %v483 = vpack.c.b16 %v375, %v371
    %v484 = vpack.c.b16 %v376, %v372
    %v485 = vpack.c.b16 %v377, %v373
    %v486 = vpack.c.b16 %v382, %v378
    %v487 = vpack.c.b16 %v383, %v379
    %v488 = vpack.c.b16 %v384, %v380
    %v489 = vpack.c.b16 %v385, %v381
    %v490 = vpack.c.b16 %v390, %v386
    %v491 = vpack.c.b16 %v391, %v387
    %v492 = vpack.c.b16 %v392, %v388
    %v493 = vpack.c.b16 %v393, %v389
    %v494 = vpack.c.b16 %v398, %v394
    %v495 = vpack.c.b16 %v399, %v395
    %v496 = vpack.c.b16 %v400, %v396
    %v497 = vpack.c.b16 %v401, %v397
    %v498 = vpack.c.b16 %v406, %v402
    %v499 = vpack.c.b16 %v407, %v403
    %v500 = vpack.c.b16 %v408, %v404
    %v501 = vpack.c.b16 %v409, %v405
    %v502 = vpack.c.b16 %v414, %v410
    %v503 = vpack.c.b16 %v415, %v411
    %v504 = vpack.c.b16 %v416, %v412
    %v505 = vpack.c.b16 %v417, %v413
    %v506 = vpack.c.b16 %v422, %v418
    %v507 = vpack.c.b16 %v423, %v419
    %v508 = vpack.c.b16 %v424, %v420
    %v509 = vpack.c.b16 %v425, %v421
    %v510 = vpack.c.b16 %v430, %v426
    %v511 = vpack.c.b16 %v431, %v427
    %v512 = vpack.c.b16 %v432, %v428
    %v513 = vpack.c.b16 %v433, %v429
    %v514 = vpack.c.b16 %v438, %v434
    %v515 = vpack.c.b16 %v439, %v435
    %v516 = vpack.c.b16 %v440, %v436
    %v517 = vpack.c.b16 %v441, %v437
    %v518 = vpack.c.b16 %v446, %v442
    %v519 = vpack.c.b16 %v447, %v443
    %v520 = vpack.c.b16 %v448, %v444
    %v521 = vpack.c.b16 %v449, %v445
    %v522 = vpack.c.b16 %v454, %v450
    %v523 = vpack.c.b16 %v455, %v451
    %v524 = vpack.c.b16 %v456, %v452
    %v525 = vpack.c.b16 %v457, %v453
    %v526 = vpack.c.b16 %v462, %v458
    %v527 = vpack.c.b16 %v463, %v459
    %v528 = vpack.c.b16 %v464, %v460
    %v529 = vpack.c.b16 %v465, %v461
    %v658 = vunpack.c.l.b16 %v146
    %v659 = vunpack.c.l.b16 %v147
    %v660 = vunpack.c.l.b16 %v148
    %v661 = vunpack.c.l.b16 %v149
    %v662 = vunpack.c.l.b16 %v150
    %v663 = vunpack.c.l.b16 %v151
    %v664 = vunpack.c.l.b16 %v152
    %v665 = vunpack.c.l.b16 %v153
    %v666 = vunpack.c.l.b16 %v154
    %v667 = vunpack.c.l.b16 %v155
    %v668 = vunpack.c.l.b16 %v156
    %v669 = vunpack.c.l.b16 %v157
    %v670 = vunpack.c.l.b16 %v158
    %v671 = vunpack.c.l.b16 %v159
    %v672 = vunpack.c.l.b16 %v160
    %v673 = vunpack.c.l.b16 %v161
    %v674 = vunpack.c.l.b16 %v162
    %v675 = vunpack.c.l.b16 %v163
    %v676 = vunpack.c.l.b16 %v164
    %v677 = vunpack.c.l.b16 %v165
    %v678 = vunpack.c.l.b16 %v166
    %v679 = vunpack.c.l.b16 %v167
    %v680 = vunpack.c.l.b16 %v168
    %v681 = vunpack.c.l.b16 %v169
    %v682 = vunpack.c.l.b16 %v170
    %v683 = vunpack.c.l.b16 %v171
    %v684 = vunpack.c.l.b16 %v172
    %v685 = vunpack.c.l.b16 %v173
    %v686 = vunpack.c.l.b16 %v174
    %v687 = vunpack.c.l.b16 %v175
    %v688 = vunpack.c.l.b16 %v176
    %v689 = vunpack.c.l.b16 %v177
    %v690 = vunpack.c.l.b16 %v178
    %v691 = vunpack.c.l.b16 %v179
    %v692 = vunpack.c.l.b16 %v180
    %v693 = vunpack.c.l.b16 %v181
    %v694 = vunpack.c.l.b16 %v182
    %v695 = vunpack.c.l.b16 %v183
    %v696 = vunpack.c.l.b16 %v184
    %v697 = vunpack.c.l.b16 %v185
    %v698 = vunpack.c.l.b16 %v186
    %v699 = vunpack.c.l.b16 %v187
    %v700 = vunpack.c.l.b16 %v188
    %v701 = vunpack.c.l.b16 %v189
    %v702 = vunpack.c.l.b16 %v190
    %v703 = vunpack.c.l.b16 %v191
    %v704 = vunpack.c.l.b16 %v192
    %v705 = vunpack.c.l.b16 %v193
    %v706 = vunpack.c.l.b16 %v194
    %v707 = vunpack.c.l.b16 %v195
    %v708 = vunpack.c.l.b16 %v196
    %v709 = vunpack.c.l.b16 %v197
    %v710 = vunpack.c.l.b16 %v198
    %v711 = vunpack.c.l.b16 %v199
    %v712 = vunpack.c.l.b16 %v200
    %v713 = vunpack.c.l.b16 %v201
    %v714 = vunpack.c.l.b16 %v202
    %v715 = vunpack.c.l.b16 %v203
    %v716 = vunpack.c.l.b16 %v204
    %v717 = vunpack.c.l.b16 %v205
    %v718 = vunpack.c.l.b16 %v206
    %v719 = vunpack.c.l.b16 %v207
    %v720 = vunpack.c.l.b16 %v208
    %v721 = vunpack.c.l.b16 %v209
    %v722 = vpack.c.b16 %v659, %v658
    %v723 = vpack.c.b16 %v661, %v660
    %v724 = vpack.c.b16 %v663, %v662
    %v725 = vpack.c.b16 %v665, %v664
    %v726 = vpack.c.b16 %v667, %v666
    %v727 = vpack.c.b16 %v669, %v668
    %v728 = vpack.c.b16 %v671, %v670
    %v729 = vpack.c.b16 %v673, %v672
    %v730 = vpack.c.b16 %v675, %v674
    %v731 = vpack.c.b16 %v677, %v676
    %v732 = vpack.c.b16 %v679, %v678
    %v733 = vpack.c.b16 %v681, %v680
    %v734 = vpack.c.b16 %v683, %v682
    %v735 = vpack.c.b16 %v685, %v684
    %v736 = vpack.c.b16 %v687, %v686
    %v737 = vpack.c.b16 %v689, %v688
    %v738 = vpack.c.b16 %v691, %v690
    %v739 = vpack.c.b16 %v693, %v692
    %v740 = vpack.c.b16 %v695, %v694
    %v741 = vpack.c.b16 %v697, %v696
    %v742 = vpack.c.b16 %v699, %v698
    %v743 = vpack.c.b16 %v701, %v700
    %v744 = vpack.c.b16 %v703, %v702
    %v745 = vpack.c.b16 %v705, %v704
    %v746 = vpack.c.b16 %v707, %v706
    %v747 = vpack.c.b16 %v709, %v708
    %v748 = vpack.c.b16 %v711, %v710
    %v749 = vpack.c.b16 %v713, %v712
    %v750 = vpack.c.b16 %v715, %v714
    %v751 = vpack.c.b16 %v717, %v716
    %v752 = vpack.c.b16 %v719, %v718
    %v753 = vpack.c.b16 %v721, %v720
    %786 = vmatprep.subr.bf16.mxu0 0
    %787 = vmatpush1.bf16.msra.mxu0 %v722
    %788 = vmatprep.subr.bf16.mxu0 0
    %789 = vmatpush1.bf16.msra.mxu0 %v723
    %790 = vmatprep.subr.bf16.mxu0 0
    %791 = vmatpush1.bf16.msra.mxu0 %v724
    %792 = vmatprep.subr.bf16.mxu0 0
    %793 = vmatpush1.bf16.msra.mxu0 %v725
    %794 = vmatprep.subr.bf16.mxu0 0
    %795 = vmatpush1.bf16.msra.mxu0 %v726
    %796 = vmatprep.subr.bf16.mxu0 0
    %797 = vmatpush1.bf16.msra.mxu0 %v727
    %798 = vmatprep.subr.bf16.mxu0 0
    %799 = vmatpush1.bf16.msra.mxu0 %v728
    %800 = vmatprep.subr.bf16.mxu0 0
    %801 = vmatpush1.bf16.msra.mxu0 %v729
    %802 = vmatprep.subr.bf16.mxu0 0
    %803 = vmatpush1.bf16.msra.mxu0 %v730
    %804 = vmatprep.subr.bf16.mxu0 0
    %805 = vmatpush1.bf16.msra.mxu0 %v731
    %806 = vmatprep.subr.bf16.mxu0 0
    %807 = vmatpush1.bf16.msra.mxu0 %v732
    %808 = vmatprep.subr.bf16.mxu0 0
    %809 = vmatpush1.bf16.msra.mxu0 %v733
    %810 = vmatprep.subr.bf16.mxu0 0
    %811 = vmatpush1.bf16.msra.mxu0 %v734
    %812 = vmatprep.subr.bf16.mxu0 0
    %813 = vmatpush1.bf16.msra.mxu0 %v735
    %814 = vmatprep.subr.bf16.mxu0 0
    %815 = vmatpush1.bf16.msra.mxu0 %v736
    %816 = vmatprep.subr.bf16.mxu0 0
    %817 = vmatpush1.bf16.msra.mxu0 %v737
    %818 = vmatprep.mubr.bf16.mxu0 %v467
    %819 = vmatmul.mubr.bf16.gmra.mrb[0].mxu0 %v466
    %v820 = vpop.f32.mrb[0].mxu0
    %v821 = vadd.f32 0.0, %v820
    %v822 = vpop.f32.mrb[0].mxu0
    %v823 = vpop.f32.mrb[0].mxu0
    %v824 = vadd.f32 0.0, %v823
    %v825 = vpop.f32.mrb[0].mxu0
    %826 = vmatprep.mubr.bf16.mxu0 %v471
    %827 = vmatmul.mubr.bf16.gmra.mrb[0].mxu0 %v470
    %v828 = vpop.f32.mrb[0].mxu0
    %v829 = vadd.f32 0.0, %v828
    %v830 = vpop.f32.mrb[0].mxu0
    %v831 = vpop.f32.mrb[0].mxu0
    %v832 = vadd.f32 0.0, %v831
    %v833 = vpop.f32.mrb[0].mxu0
    %834 = vmatprep.mubr.bf16.mxu0 %v475
    %835 = vmatmul.mubr.bf16.gmra.mrb[0].mxu0 %v474
    %v836 = vpop.f32.mrb[0].mxu0
    %v837 = vadd.f32 0.0, %v836
    %v838 = vpop.f32.mrb[0].mxu0
    %v839 = vpop.f32.mrb[0].mxu0
    %v840 = vadd.f32 0.0, %v839
    %v841 = vpop.f32.mrb[0].mxu0
    %842 = vmatprep.mubr.bf16.mxu0 %v479
    %843 = vmatmul.mubr.bf16.gmra.mrb[0].mxu0 %v478
    %v844 = vpop.f32.mrb[0].mxu0
    %v845 = vadd.f32 0.0, %v844
    %v846 = vpop.f32.mrb[0].mxu0
    %v847 = vpop.f32.mrb[0].mxu0
    %v848 = vadd.f32 0.0, %v847
    %v849 = vpop.f32.mrb[0].mxu0
    %850 = vmatprep.mubr.bf16.mxu0 %v483
    %851 = vmatmul.mubr.bf16.gmra.mrb[0].mxu0 %v482
    %v852 = vpop.f32.mrb[0].mxu0
    %v853 = vadd.f32 0.0, %v852
    %v854 = vpop.f32.mrb[0].mxu0
    %v855 = vpop.f32.mrb[0].mxu0
    %v856 = vadd.f32 0.0, %v855
    %v857 = vpop.f32.mrb[0].mxu0
    %858 = vmatprep.mubr.bf16.mxu0 %v487
    %859 = vmatmul.mubr.bf16.gmra.mrb[0].mxu0 %v486
    %v860 = vpop.f32.mrb[0].mxu0
    %v861 = vadd.f32 0.0, %v860
    %v862 = vpop.f32.mrb[0].mxu0
    %v863 = vpop.f32.mrb[0].mxu0
    %v864 = vadd.f32 0.0, %v863
    %v865 = vpop.f32.mrb[0].mxu0
    %866 = vmatprep.mubr.bf16.mxu0 %v491
    %867 = vmatmul.mubr.bf16.gmra.mrb[0].mxu0 %v490
    %v868 = vpop.f32.mrb[0].mxu0
    %v869 = vadd.f32 0.0, %v868
    %v870 = vpop.f32.mrb[0].mxu0
    %v871 = vpop.f32.mrb[0].mxu0
    %v872 = vadd.f32 0.0, %v871
    %v873 = vpop.f32.mrb[0].mxu0
    %874 = vmatprep.mubr.bf16.mxu0 %v495
    %875 = vmatmul.mubr.bf16.gmra.mrb[0].mxu0 %v494
    %v876 = vpop.f32.mrb[0].mxu0
    %v877 = vadd.f32 0.0, %v876
    %v878 = vpop.f32.mrb[0].mxu0
    %v879 = vpop.f32.mrb[0].mxu0
    %v880 = vadd.f32 0.0, %v879
    %v881 = vpop.f32.mrb[0].mxu0
    %882 = vmatprep.mubr.bf16.mxu0 %v499
    %883 = vmatmul.mubr.bf16.gmra.mrb[0].mxu0 %v498
    %v884 = vpop.f32.mrb[0].mxu0
    %v885 = vadd.f32 0.0, %v884
    %v886 = vpop.f32.mrb[0].mxu0
    %v887 = vpop.f32.mrb[0].mxu0
    %v888 = vadd.f32 0.0, %v887
    %v889 = vpop.f32.mrb[0].mxu0
    %890 = vmatprep.mubr.bf16.mxu0 %v503
    %891 = vmatmul.mubr.bf16.gmra.mrb[0].mxu0 %v502
    %v892 = vpop.f32.mrb[0].mxu0
    %v893 = vadd.f32 0.0, %v892
    %v894 = vpop.f32.mrb[0].mxu0
    %v895 = vpop.f32.mrb[0].mxu0
    %v896 = vadd.f32 0.0, %v895
    %v897 = vpop.f32.mrb[0].mxu0
    %898 = vmatprep.mubr.bf16.mxu0 %v507
    %899 = vmatmul.mubr.bf16.gmra.mrb[0].mxu0 %v506
    %v900 = vpop.f32.mrb[0].mxu0
    %v901 = vadd.f32 0.0, %v900
    %v902 = vpop.f32.mrb[0].mxu0
    %v903 = vpop.f32.mrb[0].mxu0
    %v904 = vadd.f32 0.0, %v903
    %v905 = vpop.f32.mrb[0].mxu0
    %906 = vmatprep.mubr.bf16.mxu0 %v511
    %907 = vmatmul.mubr.bf16.gmra.mrb[0].mxu0 %v510
    %v908 = vpop.f32.mrb[0].mxu0
    %v909 = vadd.f32 0.0, %v908
    %v910 = vpop.f32.mrb[0].mxu0
    %v911 = vpop.f32.mrb[0].mxu0
    %v912 = vadd.f32 0.0, %v911
    %v913 = vpop.f32.mrb[0].mxu0
    %914 = vmatprep.mubr.bf16.mxu0 %v515
    %915 = vmatmul.mubr.bf16.gmra.mrb[0].mxu0 %v514
    %v916 = vpop.f32.mrb[0].mxu0
    %v917 = vadd.f32 0.0, %v916
    %v918 = vpop.f32.mrb[0].mxu0
    %v919 = vpop.f32.mrb[0].mxu0
    %v920 = vadd.f32 0.0, %v919
    %v921 = vpop.f32.mrb[0].mxu0
    %922 = vmatprep.mubr.bf16.mxu0 %v519
    %923 = vmatmul.mubr.bf16.gmra.mrb[0].mxu0 %v518
    %v924 = vpop.f32.mrb[0].mxu0
    %v925 = vadd.f32 0.0, %v924
    %v926 = vpop.f32.mrb[0].mxu0
    %v927 = vpop.f32.mrb[0].mxu0
    %v928 = vadd.f32 0.0, %v927
    %v929 = vpop.f32.mrb[0].mxu0
    %930 = vmatprep.mubr.bf16.mxu0 %v523
    %931 = vmatmul.mubr.bf16.gmra.mrb[0].mxu0 %v522
    %v932 = vpop.f32.mrb[0].mxu0
    %v933 = vadd.f32 0.0, %v932
    %v934 = vpop.f32.mrb[0].mxu0
    %v935 = vpop.f32.mrb[0].mxu0
    %v936 = vadd.f32 0.0, %v935
    %v937 = vpop.f32.mrb[0].mxu0
    %938 = vmatprep.mubr.bf16.mxu0 %v527
    %939 = vmatmul.mubr.bf16.gmra.mrb[0].mxu0 %v526
    %v940 = vpop.f32.mrb[0].mxu0
    %v941 = vadd.f32 0.0, %v940
    %v942 = vpop.f32.mrb[0].mxu0
    %v943 = vpop.f32.mrb[0].mxu0
    %v944 = vadd.f32 0.0, %v943
    %v945 = vpop.f32.mrb[0].mxu0
    %946 = vdwg.mxu0
    %947 = vmatprep.subr.bf16.mxu0 0
    %948 = vmatpush1.bf16.msra.mxu0 %v738
    %949 = vmatprep.subr.bf16.mxu0 0
    %950 = vmatpush1.bf16.msra.mxu0 %v739
    %951 = vmatprep.subr.bf16.mxu0 0
    %952 = vmatpush1.bf16.msra.mxu0 %v740
    %953 = vmatprep.subr.bf16.mxu0 0
    %954 = vmatpush1.bf16.msra.mxu0 %v741
    %955 = vmatprep.subr.bf16.mxu0 0
    %956 = vmatpush1.bf16.msra.mxu0 %v742
    %957 = vmatprep.subr.bf16.mxu0 0
    %958 = vmatpush1.bf16.msra.mxu0 %v743
    %959 = vmatprep.subr.bf16.mxu0 0
    %960 = vmatpush1.bf16.msra.mxu0 %v744
    %961 = vmatprep.subr.bf16.mxu0 0
    %962 = vmatpush1.bf16.msra.mxu0 %v745
    %963 = vmatprep.subr.bf16.mxu0 0
    %964 = vmatpush1.bf16.msra.mxu0 %v746
    %965 = vmatprep.subr.bf16.mxu0 0
    %966 = vmatpush1.bf16.msra.mxu0 %v747
    %967 = vmatprep.subr.bf16.mxu0 0
    %968 = vmatpush1.bf16.msra.mxu0 %v748
    %969 = vmatprep.subr.bf16.mxu0 0
    %970 = vmatpush1.bf16.msra.mxu0 %v749
    %971 = vmatprep.subr.bf16.mxu0 0
    %972 = vmatpush1.bf16.msra.mxu0 %v750
    %973 = vmatprep.subr.bf16.mxu0 0
    %974 = vmatpush1.bf16.msra.mxu0 %v751
    %975 = vmatprep.subr.bf16.mxu0 0
    %976 = vmatpush1.bf16.msra.mxu0 %v752
    %977 = vmatprep.subr.bf16.mxu0 0
    %978 = vmatpush1.bf16.msra.mxu0 %v753
    %979 = vmatprep.mubr.bf16.mxu0 %v469
    %980 = vmatmul.mubr.bf16.gmra.mrb[0].mxu0 %v468
    %v981 = vpop.f32.mrb[0].mxu0
    %v982 = vadd.f32 %v821, %v981
    %v983 = vpop.f32.mrb[0].mxu0
    %v984 = vpop.f32.mrb[0].mxu0
    %v985 = vadd.f32 %v824, %v984
    %v986 = vpop.f32.mrb[0].mxu0
    %987 = vmatprep.mubr.bf16.mxu0 %v473
    %988 = vmatmul.mubr.bf16.gmra.mrb[0].mxu0 %v472
    %v989 = vpop.f32.mrb[0].mxu0
    %v990 = vadd.f32 %v829, %v989
    %v991 = vpop.f32.mrb[0].mxu0
    %v992 = vpop.f32.mrb[0].mxu0
    %v993 = vadd.f32 %v832, %v992
    %v994 = vpop.f32.mrb[0].mxu0
    %995 = vmatprep.mubr.bf16.mxu0 %v477
    %996 = vmatmul.mubr.bf16.gmra.mrb[0].mxu0 %v476
    %v997 = vpop.f32.mrb[0].mxu0
    %v998 = vadd.f32 %v837, %v997
    %v999 = vpop.f32.mrb[0].mxu0
    %v1000 = vpop.f32.mrb[0].mxu0
    %v1001 = vadd.f32 %v840, %v1000
    %v1002 = vpop.f32.mrb[0].mxu0
    %1003 = vmatprep.mubr.bf16.mxu0 %v481
    %1004 = vmatmul.mubr.bf16.gmra.mrb[0].mxu0 %v480
    %v1005 = vpop.f32.mrb[0].mxu0
    %v1006 = vadd.f32 %v845, %v1005
    %v1007 = vpop.f32.mrb[0].mxu0
    %v1008 = vpop.f32.mrb[0].mxu0
    %v1009 = vadd.f32 %v848, %v1008
    %v1010 = vpop.f32.mrb[0].mxu0
    %1011 = vmatprep.mubr.bf16.mxu0 %v485
    %1012 = vmatmul.mubr.bf16.gmra.mrb[0].mxu0 %v484
    %v1013 = vpop.f32.mrb[0].mxu0
    %v1014 = vadd.f32 %v853, %v1013
    %v1015 = vpop.f32.mrb[0].mxu0
    %v1016 = vpop.f32.mrb[0].mxu0
    %v1017 = vadd.f32 %v856, %v1016
    %v1018 = vpop.f32.mrb[0].mxu0
    %1019 = vmatprep.mubr.bf16.mxu0 %v489
    %1020 = vmatmul.mubr.bf16.gmra.mrb[0].mxu0 %v488
    %v1021 = vpop.f32.mrb[0].mxu0
    %v1022 = vadd.f32 %v861, %v1021
    %v1023 = vpop.f32.mrb[0].mxu0
    %v1024 = vpop.f32.mrb[0].mxu0
    %v1025 = vadd.f32 %v864, %v1024
    %v1026 = vpop.f32.mrb[0].mxu0
    %1027 = vmatprep.mubr.bf16.mxu0 %v493
    %1028 = vmatmul.mubr.bf16.gmra.mrb[0].mxu0 %v492
    %v1029 = vpop.f32.mrb[0].mxu0
    %v1030 = vadd.f32 %v869, %v1029
    %v1031 = vpop.f32.mrb[0].mxu0
    %v1032 = vpop.f32.mrb[0].mxu0
    %v1033 = vadd.f32 %v872, %v1032
    %v1034 = vpop.f32.mrb[0].mxu0
    %1035 = vmatprep.mubr.bf16.mxu0 %v497
    %1036 = vmatmul.mubr.bf16.gmra.mrb[0].mxu0 %v496
    %v1037 = vpop.f32.mrb[0].mxu0
    %v1038 = vadd.f32 %v877, %v1037
    %v1039 = vpop.f32.mrb[0].mxu0
    %v1040 = vpop.f32.mrb[0].mxu0
    %v1041 = vadd.f32 %v880, %v1040
    %v1042 = vpop.f32.mrb[0].mxu0
    %1043 = vmatprep.mubr.bf16.mxu0 %v501
    %1044 = vmatmul.mubr.bf16.gmra.mrb[0].mxu0 %v500
    %v1045 = vpop.f32.mrb[0].mxu0
    %v1046 = vadd.f32 %v885, %v1045
    %v1047 = vpop.f32.mrb[0].mxu0
    %v1048 = vpop.f32.mrb[0].mxu0
    %v1049 = vadd.f32 %v888, %v1048
    %v1050 = vpop.f32.mrb[0].mxu0
    %1051 = vmatprep.mubr.bf16.mxu0 %v505
    %1052 = vmatmul.mubr.bf16.gmra.mrb[0].mxu0 %v504
    %v1053 = vpop.f32.mrb[0].mxu0
    %v1054 = vadd.f32 %v893, %v1053
    %v1055 = vpop.f32.mrb[0].mxu0
    %v1056 = vpop.f32.mrb[0].mxu0
    %v1057 = vadd.f32 %v896, %v1056
    %v1058 = vpop.f32.mrb[0].mxu0
    %1059 = vmatprep.mubr.bf16.mxu0 %v509
    %1060 = vmatmul.mubr.bf16.gmra.mrb[0].mxu0 %v508
    %v1061 = vpop.f32.mrb[0].mxu0
    %v1062 = vadd.f32 %v901, %v1061
    %v1063 = vpop.f32.mrb[0].mxu0
    %v1064 = vpop.f32.mrb[0].mxu0
    %v1065 = vadd.f32 %v904, %v1064
    %v1066 = vpop.f32.mrb[0].mxu0
    %1067 = vmatprep.mubr.bf16.mxu0 %v513
    %1068 = vmatmul.mubr.bf16.gmra.mrb[0].mxu0 %v512
    %v1069 = vpop.f32.mrb[0].mxu0
    %v1070 = vadd.f32 %v909, %v1069
    %v1071 = vpop.f32.mrb[0].mxu0
    %v1072 = vpop.f32.mrb[0].mxu0
    %v1073 = vadd.f32 %v912, %v1072
    %v1074 = vpop.f32.mrb[0].mxu0
    %1075 = vmatprep.mubr.bf16.mxu0 %v517
    %1076 = vmatmul.mubr.bf16.gmra.mrb[0].mxu0 %v516
    %v1077 = vpop.f32.mrb[0].mxu0
    %v1078 = vadd.f32 %v917, %v1077
    %v1079 = vpop.f32.mrb[0].mxu0
    %v1080 = vpop.f32.mrb[0].mxu0
    %v1081 = vadd.f32 %v920, %v1080
    %v1082 = vpop.f32.mrb[0].mxu0
    %1083 = vmatprep.mubr.bf16.mxu0 %v521
    %1084 = vmatmul.mubr.bf16.gmra.mrb[0].mxu0 %v520
    %v1085 = vpop.f32.mrb[0].mxu0
    %v1086 = vadd.f32 %v925, %v1085
    %v1087 = vpop.f32.mrb[0].mxu0
    %v1088 = vpop.f32.mrb[0].mxu0
    %v1089 = vadd.f32 %v928, %v1088
    %v1090 = vpop.f32.mrb[0].mxu0
    %1091 = vmatprep.mubr.bf16.mxu0 %v525
    %1092 = vmatmul.mubr.bf16.gmra.mrb[0].mxu0 %v524
    %v1093 = vpop.f32.mrb[0].mxu0
    %v1094 = vadd.f32 %v933, %v1093
    %v1095 = vpop.f32.mrb[0].mxu0
    %v1096 = vpop.f32.mrb[0].mxu0
    %v1097 = vadd.f32 %v936, %v1096
    %v1098 = vpop.f32.mrb[0].mxu0
    %1099 = vmatprep.mubr.bf16.mxu0 %v529
    %1100 = vmatmul.mubr.bf16.gmra.mrb[0].mxu0 %v528
    %v1101 = vpop.f32.mrb[0].mxu0
    %v1102 = vadd.f32 %v941, %v1101
    %v1103 = vpop.f32.mrb[0].mxu0
    %v1104 = vpop.f32.mrb[0].mxu0
    %v1105 = vadd.f32 %v944, %v1104
    %v1106 = vpop.f32.mrb[0].mxu0
    %1107 = vdwg.mxu0
    %v1108 = vld [vmem:[#allocation5] sm:$0xff]
    %v1109 = vld [vmem:[#allocation5 + $0x8] sm:$0xff]
    %v1110 = vld [vmem:[#allocation5 + $0x10] sm:$0xff]
    %v1111 = vld [vmem:[#allocation5 + $0x18] sm:$0xff]
    %v1112 = vld [vmem:[#allocation5 + $0x20] sm:$0xff]
    %v1113 = vld [vmem:[#allocation5 + $0x28] sm:$0xff]
    %v1114 = vld [vmem:[#allocation5 + $0x30] sm:$0xff]
    %v1115 = vld [vmem:[#allocation5 + $0x38] sm:$0xff]
    %v1116 = vld [vmem:[#allocation5 + $0x40] sm:$0xff]
    %v1117 = vld [vmem:[#allocation5 + $0x48] sm:$0xff]
    %v1118 = vld [vmem:[#allocation5 + $0x50] sm:$0xff]
    %v1119 = vld [vmem:[#allocation5 + $0x58] sm:$0xff]
    %v1120 = vld [vmem:[#allocation5 + $0x60] sm:$0xff]
    %v1121 = vld [vmem:[#allocation5 + $0x68] sm:$0xff]
    %v1122 = vld [vmem:[#allocation5 + $0x70] sm:$0xff]
    %v1123 = vld [vmem:[#allocation5 + $0x78] sm:$0xff]
    %v1124 = vpack.c.bf16 %v985, %v982
    %v1125 = vpack.c.bf16 %v993, %v990
    %v1126 = vpack.c.bf16 %v1001, %v998
    %v1127 = vpack.c.bf16 %v1009, %v1006
    %v1128 = vpack.c.bf16 %v1017, %v1014
    %v1129 = vpack.c.bf16 %v1025, %v1022
    %v1130 = vpack.c.bf16 %v1033, %v1030
    %v1131 = vpack.c.bf16 %v1041, %v1038
    %v1132 = vpack.c.bf16 %v1049, %v1046
    %v1133 = vpack.c.bf16 %v1057, %v1054
    %v1134 = vpack.c.bf16 %v1065, %v1062
    %v1135 = vpack.c.bf16 %v1073, %v1070
    %v1136 = vpack.c.bf16 %v1081, %v1078
    %v1137 = vpack.c.bf16 %v1089, %v1086
    %v1138 = vpack.c.bf16 %v1097, %v1094
    %v1139 = vpack.c.bf16 %v1105, %v1102
    %v1156 = vunpack.c.l.b16 %v1108
    %v1157 = vunpack.c.h.b16 %v1108
    %v1158 = vunpack.c.l.b16 %v1109
    %v1159 = vunpack.c.h.b16 %v1109
    %v1160 = vunpack.c.l.b16 %v1110
    %v1161 = vunpack.c.h.b16 %v1110
    %v1162 = vunpack.c.l.b16 %v1111
    %v1163 = vunpack.c.h.b16 %v1111
    %v1164 = vunpack.c.l.b16 %v1112
    %v1165 = vunpack.c.h.b16 %v1112
    %v1166 = vunpack.c.l.b16 %v1113
    %v1167 = vunpack.c.h.b16 %v1113
    %v1168 = vunpack.c.l.b16 %v1114
    %v1169 = vunpack.c.h.b16 %v1114
    %v1170 = vunpack.c.l.b16 %v1115
    %v1171 = vunpack.c.h.b16 %v1115
    %v1172 = vunpack.c.l.b16 %v1116
    %v1173 = vunpack.c.h.b16 %v1116
    %v1174 = vunpack.c.l.b16 %v1117
    %v1175 = vunpack.c.h.b16 %v1117
    %v1176 = vunpack.c.l.b16 %v1118
    %v1177 = vunpack.c.h.b16 %v1118
    %v1178 = vunpack.c.l.b16 %v1119
    %v1179 = vunpack.c.h.b16 %v1119
    %v1180 = vunpack.c.l.b16 %v1120
    %v1181 = vunpack.c.h.b16 %v1120
    %v1182 = vunpack.c.l.b16 %v1121
    %v1183 = vunpack.c.h.b16 %v1121
    %v1184 = vunpack.c.l.b16 %v1122
    %v1185 = vunpack.c.h.b16 %v1122
    %v1186 = vunpack.c.l.b16 %v1123
    %v1187 = vunpack.c.h.b16 %v1123
    %v1188 = vpack.c.b16 %v1158, %v1156
    %v1189 = vpack.c.b16 %v1159, %v1157
    %v1190 = vpack.c.b16 %v1162, %v1160
    %v1191 = vpack.c.b16 %v1163, %v1161
    %v1192 = vpack.c.b16 %v1166, %v1164
    %v1193 = vpack.c.b16 %v1167, %v1165
    %v1194 = vpack.c.b16 %v1170, %v1168
    %v1195 = vpack.c.b16 %v1171, %v1169
    %v1196 = vpack.c.b16 %v1174, %v1172
    %v1197 = vpack.c.b16 %v1175, %v1173
    %v1198 = vpack.c.b16 %v1178, %v1176
    %v1199 = vpack.c.b16 %v1179, %v1177
    %v1200 = vpack.c.b16 %v1182, %v1180
    %v1201 = vpack.c.b16 %v1183, %v1181
    %v1202 = vpack.c.b16 %v1186, %v1184
    %v1203 = vpack.c.b16 %v1187, %v1185
    %1220 = vmatprep.subr.bf16.mxu0 0
    %1221 = vmatpush1.bf16.msra.mxu0 %v1124
    %1222 = vmatprep.subr.bf16.mxu0 0
    %1223 = vmatpush1.bf16.msra.mxu0 %v1125
    %1224 = vmatprep.subr.bf16.mxu0 0
    %1225 = vmatpush1.bf16.msra.mxu0 %v1126
    %1226 = vmatprep.subr.bf16.mxu0 0
    %1227 = vmatpush1.bf16.msra.mxu0 %v1127
    %1228 = vmatprep.subr.bf16.mxu0 0
    %1229 = vmatpush1.bf16.msra.mxu0 %v1128
    %1230 = vmatprep.subr.bf16.mxu0 0
    %1231 = vmatpush1.bf16.msra.mxu0 %v1129
    %1232 = vmatprep.subr.bf16.mxu0 0
    %1233 = vmatpush1.bf16.msra.mxu0 %v1130
    %1234 = vmatprep.subr.bf16.mxu0 0
    %1235 = vmatpush1.bf16.msra.mxu0 %v1131
    %1236 = vmatprep.subr.bf16.mxu0 0
    %1237 = vmatpush1.bf16.msra.mxu0 %v1132
    %1238 = vmatprep.subr.bf16.mxu0 0
    %1239 = vmatpush1.bf16.msra.mxu0 %v1133
    %1240 = vmatprep.subr.bf16.mxu0 0
    %1241 = vmatpush1.bf16.msra.mxu0 %v1134
    %1242 = vmatprep.subr.bf16.mxu0 0
    %1243 = vmatpush1.bf16.msra.mxu0 %v1135
    %1244 = vmatprep.subr.bf16.mxu0 0
    %1245 = vmatpush1.bf16.msra.mxu0 %v1136
    %1246 = vmatprep.subr.bf16.mxu0 0
    %1247 = vmatpush1.bf16.msra.mxu0 %v1137
    %1248 = vmatprep.subr.bf16.mxu0 0
    %1249 = vmatpush1.bf16.msra.mxu0 %v1138
    %1250 = vmatprep.subr.bf16.mxu0 0
    %1251 = vmatpush1.bf16.msra.mxu0 %v1139
    %1252 = vmatprep.mubr.bf16.mxu0 %v1189
    %1253 = vmatmul.mubr.bf16.gmra.mrb[0].mxu0 %v1188
    %v1254 = vpop.f32.mrb[0].mxu0
    %v1255 = vadd.f32 0.0, %v1254
    %v1256 = vpop.f32.mrb[0].mxu0
    %v1257 = vpop.f32.mrb[0].mxu0
    %v1258 = vadd.f32 0.0, %v1257
    %v1259 = vpop.f32.mrb[0].mxu0
    %1260 = vmatprep.mubr.bf16.mxu0 %v1191
    %1261 = vmatmul.mubr.bf16.gmra.mrb[0].mxu0 %v1190
    %v1262 = vpop.f32.mrb[0].mxu0
    %v1263 = vadd.f32 0.0, %v1262
    %v1264 = vpop.f32.mrb[0].mxu0
    %v1265 = vpop.f32.mrb[0].mxu0
    %v1266 = vadd.f32 0.0, %v1265
    %v1267 = vpop.f32.mrb[0].mxu0
    %1268 = vmatprep.mubr.bf16.mxu0 %v1193
    %1269 = vmatmul.mubr.bf16.gmra.mrb[0].mxu0 %v1192
    %v1270 = vpop.f32.mrb[0].mxu0
    %v1271 = vadd.f32 0.0, %v1270
    %v1272 = vpop.f32.mrb[0].mxu0
    %v1273 = vpop.f32.mrb[0].mxu0
    %v1274 = vadd.f32 0.0, %v1273
    %v1275 = vpop.f32.mrb[0].mxu0
    %1276 = vmatprep.mubr.bf16.mxu0 %v1195
    %1277 = vmatmul.mubr.bf16.gmra.mrb[0].mxu0 %v1194
    %v1278 = vpop.f32.mrb[0].mxu0
    %v1279 = vadd.f32 0.0, %v1278
    %v1280 = vpop.f32.mrb[0].mxu0
    %v1281 = vpop.f32.mrb[0].mxu0
    %v1282 = vadd.f32 0.0, %v1281
    %v1283 = vpop.f32.mrb[0].mxu0
    %1284 = vmatprep.mubr.bf16.mxu0 %v1197
    %1285 = vmatmul.mubr.bf16.gmra.mrb[0].mxu0 %v1196
    %v1286 = vpop.f32.mrb[0].mxu0
    %v1287 = vadd.f32 0.0, %v1286
    %v1288 = vpop.f32.mrb[0].mxu0
    %v1289 = vpop.f32.mrb[0].mxu0
    %v1290 = vadd.f32 0.0, %v1289
    %v1291 = vpop.f32.mrb[0].mxu0
    %1292 = vmatprep.mubr.bf16.mxu0 %v1199
    %1293 = vmatmul.mubr.bf16.gmra.mrb[0].mxu0 %v1198
    %v1294 = vpop.f32.mrb[0].mxu0
    %v1295 = vadd.f32 0.0, %v1294
    %v1296 = vpop.f32.mrb[0].mxu0
    %v1297 = vpop.f32.mrb[0].mxu0
    %v1298 = vadd.f32 0.0, %v1297
    %v1299 = vpop.f32.mrb[0].mxu0
    %1300 = vmatprep.mubr.bf16.mxu0 %v1201
    %1301 = vmatmul.mubr.bf16.gmra.mrb[0].mxu0 %v1200
    %v1302 = vpop.f32.mrb[0].mxu0
    %v1303 = vadd.f32 0.0, %v1302
    %v1304 = vpop.f32.mrb[0].mxu0
    %v1305 = vpop.f32.mrb[0].mxu0
    %v1306 = vadd.f32 0.0, %v1305
    %v1307 = vpop.f32.mrb[0].mxu0
    %1308 = vmatprep.mubr.bf16.mxu0 %v1203
    %1309 = vmatmul.mubr.bf16.gmra.mrb[0].mxu0 %v1202
    %v1310 = vpop.f32.mrb[0].mxu0
    %v1311 = vadd.f32 0.0, %v1310
    %v1312 = vpop.f32.mrb[0].mxu0
    %v1313 = vpop.f32.mrb[0].mxu0
    %v1314 = vadd.f32 0.0, %v1313
    %v1315 = vpop.f32.mrb[0].mxu0
    %1316 = vdwg.mxu0
    %v1317 = vld [vmem:[#allocation10] sm:$0xf]
    %v1318 = vld [vmem:[#allocation10 + $0x4] sm:$0xf]
    %v1319 = vld [vmem:[#allocation10 + $0x8] sm:$0xf]
    %v1320 = vld [vmem:[#allocation10 + $0xc] sm:$0xf]
    %v1321 = vld [vmem:[#allocation10 + $0x10] sm:$0xf]
    %v1322 = vld [vmem:[#allocation10 + $0x14] sm:$0xf]
    %v1323 = vld [vmem:[#allocation10 + $0x18] sm:$0xf]
    %v1324 = vld [vmem:[#allocation10 + $0x1c] sm:$0xf]
    %v1325 = vld [vmem:[#allocation10 + $0x20] sm:$0xf]
    %v1326 = vld [vmem:[#allocation10 + $0x24] sm:$0xf]
    %v1327 = vld [vmem:[#allocation10 + $0x28] sm:$0xf]
    %v1328 = vld [vmem:[#allocation10 + $0x2c] sm:$0xf]
    %v1329 = vld [vmem:[#allocation10 + $0x30] sm:$0xf]
    %v1330 = vld [vmem:[#allocation10 + $0x34] sm:$0xf]
    %v1331 = vld [vmem:[#allocation10 + $0x38] sm:$0xf]
    %v1332 = vld [vmem:[#allocation10 + $0x3c] sm:$0xf]
    %v1333 = vpack.c.bf16 %v1258, %v1255
    %v1334 = vpack.c.bf16 %v1266, %v1263
    %v1335 = vpack.c.bf16 %v1274, %v1271
    %v1336 = vpack.c.bf16 %v1282, %v1279
    %v1337 = vpack.c.bf16 %v1290, %v1287
    %v1338 = vpack.c.bf16 %v1298, %v1295
    %v1339 = vpack.c.bf16 %v1306, %v1303
    %v1340 = vpack.c.bf16 %v1314, %v1311
    %v1341 = vld [vmem:[#allocation13] sm:$0xf]
    %v1342 = vld [vmem:[#allocation13 + $0x4] sm:$0xf]
    %v1343 = vld [vmem:[#allocation13 + $0x8] sm:$0xf]
    %v1344 = vld [vmem:[#allocation13 + $0xc] sm:$0xf]
    %v1345 = vld [vmem:[#allocation13 + $0x10] sm:$0xf]
    %v1346 = vld [vmem:[#allocation13 + $0x14] sm:$0xf]
    %v1347 = vld [vmem:[#allocation13 + $0x18] sm:$0xf]
    %v1348 = vld [vmem:[#allocation13 + $0x1c] sm:$0xf]
    %v1349 = vld [vmem:[#allocation13 + $0x20] sm:$0xf]
    %v1350 = vld [vmem:[#allocation13 + $0x24] sm:$0xf]
    %v1351 = vld [vmem:[#allocation13 + $0x28] sm:$0xf]
    %v1352 = vld [vmem:[#allocation13 + $0x2c] sm:$0xf]
    %v1353 = vld [vmem:[#allocation13 + $0x30] sm:$0xf]
    %v1354 = vld [vmem:[#allocation13 + $0x34] sm:$0xf]
    %v1355 = vld [vmem:[#allocation13 + $0x38] sm:$0xf]
    %v1356 = vld [vmem:[#allocation13 + $0x3c] sm:$0xf]
    %v1373 = vunpack.c.l.b16 %v1341
    %v1374 = vunpack.c.l.b16 %v1342
    %v1375 = vunpack.c.l.b16 %v1343
    %v1376 = vunpack.c.l.b16 %v1344
    %v1377 = vunpack.c.l.b16 %v1345
    %v1378 = vunpack.c.l.b16 %v1346
    %v1379 = vunpack.c.l.b16 %v1347
    %v1380 = vunpack.c.l.b16 %v1348
    %v1381 = vunpack.c.l.b16 %v1349
    %v1382 = vunpack.c.l.b16 %v1350
    %v1383 = vunpack.c.l.b16 %v1351
    %v1384 = vunpack.c.l.b16 %v1352
    %v1385 = vunpack.c.l.b16 %v1353
    %v1386 = vunpack.c.l.b16 %v1354
    %v1387 = vunpack.c.l.b16 %v1355
    %v1388 = vunpack.c.l.b16 %v1356
    %v1389 = vpack.c.b16 %v1374, %v1373
    %v1390 = vpack.c.b16 %v1376, %v1375
    %v1391 = vpack.c.b16 %v1378, %v1377
    %v1392 = vpack.c.b16 %v1380, %v1379
    %v1393 = vpack.c.b16 %v1382, %v1381
    %v1394 = vpack.c.b16 %v1384, %v1383
    %v1395 = vpack.c.b16 %v1386, %v1385
    %v1396 = vpack.c.b16 %v1388, %v1387
    %1405 = vmatprep.subr.bf16.mxu0 0
    %1406 = vmatpush1.bf16.msra.mxu0 %v1389
    %1407 = vmatprep.subr.bf16.mxu0 0
    %1408 = vmatpush1.bf16.msra.mxu0 %v1390
    %1409 = vmatprep.subr.bf16.mxu0 0
    %1410 = vmatpush1.bf16.msra.mxu0 %v1391
    %1411 = vmatprep.subr.bf16.mxu0 0
    %1412 = vmatpush1.bf16.msra.mxu0 %v1392
    %1413 = vmatprep.subr.bf16.mxu0 0
    %1414 = vmatpush1.bf16.msra.mxu0 %v1393
    %1415 = vmatprep.subr.bf16.mxu0 0
    %1416 = vmatpush1.bf16.msra.mxu0 %v1394
    %1417 = vmatprep.subr.bf16.mxu0 0
    %1418 = vmatpush1.bf16.msra.mxu0 %v1395
    %1419 = vmatprep.subr.bf16.mxu0 0
    %1420 = vmatpush1.bf16.msra.mxu0 %v1396
    %1421 = vmatprep.subr.bf16.mxu0 0
    %1422 = vmatpush1.bf16.msra.mxu0 0
    %1423 = vmatprep.subr.bf16.mxu0 0
    %1424 = vmatpush1.bf16.msra.mxu0 0
    %1425 = vmatprep.subr.bf16.mxu0 0
    %1426 = vmatpush1.bf16.msra.mxu0 0
    %1427 = vmatprep.subr.bf16.mxu0 0
    %1428 = vmatpush1.bf16.msra.mxu0 0
    %1429 = vmatprep.subr.bf16.mxu0 0
    %1430 = vmatpush1.bf16.msra.mxu0 0
    %1431 = vmatprep.subr.bf16.mxu0 0
    %1432 = vmatpush1.bf16.msra.mxu0 0
    %1433 = vmatprep.subr.bf16.mxu0 0
    %1434 = vmatpush1.bf16.msra.mxu0 0
    %1435 = vmatprep.subr.bf16.mxu0 0
    %1436 = vmatpush1.bf16.msra.mxu0 0
    %1437 = vmatprep.mubr.bf16.mxu0 0
    %1438 = vmatmul.mubr.bf16.gmra.mrb[0].mxu0 %v1333
    %v1439 = vpop.f32.mrb[0].mxu0
    %v1440 = vadd.f32 0.0, %v1439
    %v1441 = vpop.f32.mrb[0].mxu0
    %v1442 = vpop.f32.mrb[0].mxu0
    %v1443 = vadd.f32 0.0, %v1442
    %v1444 = vpop.f32.mrb[0].mxu0
    %1445 = vmatprep.mubr.bf16.mxu0 0
    %1446 = vmatmul.mubr.bf16.gmra.mrb[0].mxu0 %v1334
    %v1447 = vpop.f32.mrb[0].mxu0
    %v1448 = vadd.f32 0.0, %v1447
    %v1449 = vpop.f32.mrb[0].mxu0
    %v1450 = vpop.f32.mrb[0].mxu0
    %v1451 = vadd.f32 0.0, %v1450
    %v1452 = vpop.f32.mrb[0].mxu0
    %1453 = vmatprep.mubr.bf16.mxu0 0
    %1454 = vmatmul.mubr.bf16.gmra.mrb[0].mxu0 %v1335
    %v1455 = vpop.f32.mrb[0].mxu0
    %v1456 = vadd.f32 0.0, %v1455
    %v1457 = vpop.f32.mrb[0].mxu0
    %v1458 = vpop.f32.mrb[0].mxu0
    %v1459 = vadd.f32 0.0, %v1458
    %v1460 = vpop.f32.mrb[0].mxu0
    %1461 = vmatprep.mubr.bf16.mxu0 0
    %1462 = vmatmul.mubr.bf16.gmra.mrb[0].mxu0 %v1336
    %v1463 = vpop.f32.mrb[0].mxu0
    %v1464 = vadd.f32 0.0, %v1463
    %v1465 = vpop.f32.mrb[0].mxu0
    %v1466 = vpop.f32.mrb[0].mxu0
    %v1467 = vadd.f32 0.0, %v1466
    %v1468 = vpop.f32.mrb[0].mxu0
    %1469 = vmatprep.mubr.bf16.mxu0 0
    %1470 = vmatmul.mubr.bf16.gmra.mrb[0].mxu0 %v1337
    %v1471 = vpop.f32.mrb[0].mxu0
    %v1472 = vadd.f32 0.0, %v1471
    %v1473 = vpop.f32.mrb[0].mxu0
    %v1474 = vpop.f32.mrb[0].mxu0
    %v1475 = vadd.f32 0.0, %v1474
    %v1476 = vpop.f32.mrb[0].mxu0
    %1477 = vmatprep.mubr.bf16.mxu0 0
    %1478 = vmatmul.mubr.bf16.gmra.mrb[0].mxu0 %v1338
    %v1479 = vpop.f32.mrb[0].mxu0
    %v1480 = vadd.f32 0.0, %v1479
    %v1481 = vpop.f32.mrb[0].mxu0
    %v1482 = vpop.f32.mrb[0].mxu0
    %v1483 = vadd.f32 0.0, %v1482
    %v1484 = vpop.f32.mrb[0].mxu0
    %1485 = vmatprep.mubr.bf16.mxu0 0
    %1486 = vmatmul.mubr.bf16.gmra.mrb[0].mxu0 %v1339
    %v1487 = vpop.f32.mrb[0].mxu0
    %v1488 = vadd.f32 0.0, %v1487
    %v1489 = vpop.f32.mrb[0].mxu0
    %v1490 = vpop.f32.mrb[0].mxu0
    %v1491 = vadd.f32 0.0, %v1490
    %v1492 = vpop.f32.mrb[0].mxu0
    %1493 = vmatprep.mubr.bf16.mxu0 0
    %1494 = vmatmul.mubr.bf16.gmra.mrb[0].mxu0 %v1340
    %v1495 = vpop.f32.mrb[0].mxu0
    %v1496 = vadd.f32 0.0, %v1495
    %v1497 = vpop.f32.mrb[0].mxu0
    %v1498 = vpop.f32.mrb[0].mxu0
    %v1499 = vadd.f32 0.0, %v1498
    %v1500 = vpop.f32.mrb[0].mxu0
    %1501 = vdwg.mxu0
    %v1518 = vunpack.c.l.b16 %v1317
    %v1519 = vunpack.c.l.b16 %v1318
    %v1520 = vunpack.c.l.b16 %v1319
    %v1521 = vunpack.c.l.b16 %v1320
    %v1522 = vunpack.c.l.b16 %v1321
    %v1523 = vunpack.c.l.b16 %v1322
    %v1524 = vunpack.c.l.b16 %v1323
    %v1525 = vunpack.c.l.b16 %v1324
    %v1526 = vunpack.c.l.b16 %v1325
    %v1527 = vunpack.c.l.b16 %v1326
    %v1528 = vunpack.c.l.b16 %v1327
    %v1529 = vunpack.c.l.b16 %v1328
    %v1530 = vunpack.c.l.b16 %v1329
    %v1531 = vunpack.c.l.b16 %v1330
    %v1532 = vunpack.c.l.b16 %v1331
    %v1533 = vunpack.c.l.b16 %v1332
    %v1534 = vpack.c.b16 %v1519, %v1518
    %v1535 = vpack.c.b16 %v1521, %v1520
    %v1536 = vpack.c.b16 %v1523, %v1522
    %v1537 = vpack.c.b16 %v1525, %v1524
    %v1538 = vpack.c.b16 %v1527, %v1526
    %v1539 = vpack.c.b16 %v1529, %v1528
    %v1540 = vpack.c.b16 %v1531, %v1530
    %v1541 = vpack.c.b16 %v1533, %v1532
    %1550 = vmatprep.subr.bf16.mxu0 0
    %1551 = vmatpush1.bf16.msra.mxu0 %v1534
    %1552 = vmatprep.subr.bf16.mxu0 0
    %1553 = vmatpush1.bf16.msra.mxu0 %v1535
    %1554 = vmatprep.subr.bf16.mxu0 0
    %1555 = vmatpush1.bf16.msra.mxu0 %v1536
    %1556 = vmatprep.subr.bf16.mxu0 0
    %1557 = vmatpush1.bf16.msra.mxu0 %v1537
    %1558 = vmatprep.subr.bf16.mxu0 0
    %1559 = vmatpush1.bf16.msra.mxu0 %v1538
    %1560 = vmatprep.subr.bf16.mxu0 0
    %1561 = vmatpush1.bf16.msra.mxu0 %v1539
    %1562 = vmatprep.subr.bf16.mxu0 0
    %1563 = vmatpush1.bf16.msra.mxu0 %v1540
    %1564 = vmatprep.subr.bf16.mxu0 0
    %1565 = vmatpush1.bf16.msra.mxu0 %v1541
    %1566 = vmatprep.subr.bf16.mxu0 0
    %1567 = vmatpush1.bf16.msra.mxu0 0
    %1568 = vmatprep.subr.bf16.mxu0 0
    %1569 = vmatpush1.bf16.msra.mxu0 0
    %1570 = vmatprep.subr.bf16.mxu0 0
    %1571 = vmatpush1.bf16.msra.mxu0 0
    %1572 = vmatprep.subr.bf16.mxu0 0
    %1573 = vmatpush1.bf16.msra.mxu0 0
    %1574 = vmatprep.subr.bf16.mxu0 0
    %1575 = vmatpush1.bf16.msra.mxu0 0
    %1576 = vmatprep.subr.bf16.mxu0 0
    %1577 = vmatpush1.bf16.msra.mxu0 0
    %1578 = vmatprep.subr.bf16.mxu0 0
    %1579 = vmatpush1.bf16.msra.mxu0 0
    %1580 = vmatprep.subr.bf16.mxu0 0
    %1581 = vmatpush1.bf16.msra.mxu0 0
    %1582 = vmatprep.mubr.bf16.mxu0 0
    %1583 = vmatmul.mubr.bf16.gmra.mrb[0].mxu0 %v722
    %v1584 = vpop.f32.mrb[0].mxu0
    %v1585 = vadd.f32 %v1440, %v1584
    %v1586 = vpop.f32.mrb[0].mxu0
    %v1587 = vpop.f32.mrb[0].mxu0
    %v1588 = vadd.f32 %v1443, %v1587
    %v1589 = vpop.f32.mrb[0].mxu0
    %1590 = vmatprep.mubr.bf16.mxu0 0
    %1591 = vmatmul.mubr.bf16.gmra.mrb[0].mxu0 %v723
    %v1592 = vpop.f32.mrb[0].mxu0
    %v1593 = vadd.f32 %v1448, %v1592
    %v1594 = vpop.f32.mrb[0].mxu0
    %v1595 = vpop.f32.mrb[0].mxu0
    %v1596 = vadd.f32 %v1451, %v1595
    %v1597 = vpop.f32.mrb[0].mxu0
    %1598 = vmatprep.mubr.bf16.mxu0 0
    %1599 = vmatmul.mubr.bf16.gmra.mrb[0].mxu0 %v724
    %v1600 = vpop.f32.mrb[0].mxu0
    %v1601 = vadd.f32 %v1456, %v1600
    %v1602 = vpop.f32.mrb[0].mxu0
    %v1603 = vpop.f32.mrb[0].mxu0
    %v1604 = vadd.f32 %v1459, %v1603
    %v1605 = vpop.f32.mrb[0].mxu0
    %1606 = vmatprep.mubr.bf16.mxu0 0
    %1607 = vmatmul.mubr.bf16.gmra.mrb[0].mxu0 %v725
    %v1608 = vpop.f32.mrb[0].mxu0
    %v1609 = vadd.f32 %v1464, %v1608
    %v1610 = vpop.f32.mrb[0].mxu0
    %v1611 = vpop.f32.mrb[0].mxu0
    %v1612 = vadd.f32 %v1467, %v1611
    %v1613 = vpop.f32.mrb[0].mxu0
    %1614 = vmatprep.mubr.bf16.mxu0 0
    %1615 = vmatmul.mubr.bf16.gmra.mrb[0].mxu0 %v726
    %v1616 = vpop.f32.mrb[0].mxu0
    %v1617 = vadd.f32 %v1472, %v1616
    %v1618 = vpop.f32.mrb[0].mxu0
    %v1619 = vpop.f32.mrb[0].mxu0
    %v1620 = vadd.f32 %v1475, %v1619
    %v1621 = vpop.f32.mrb[0].mxu0
    %1622 = vmatprep.mubr.bf16.mxu0 0
    %1623 = vmatmul.mubr.bf16.gmra.mrb[0].mxu0 %v727
    %v1624 = vpop.f32.mrb[0].mxu0
    %v1625 = vadd.f32 %v1480, %v1624
    %v1626 = vpop.f32.mrb[0].mxu0
    %v1627 = vpop.f32.mrb[0].mxu0
    %v1628 = vadd.f32 %v1483, %v1627
    %v1629 = vpop.f32.mrb[0].mxu0
    %1630 = vmatprep.mubr.bf16.mxu0 0
    %1631 = vmatmul.mubr.bf16.gmra.mrb[0].mxu0 %v728
    %v1632 = vpop.f32.mrb[0].mxu0
    %v1633 = vadd.f32 %v1488, %v1632
    %v1634 = vpop.f32.mrb[0].mxu0
    %v1635 = vpop.f32.mrb[0].mxu0
    %v1636 = vadd.f32 %v1491, %v1635
    %v1637 = vpop.f32.mrb[0].mxu0
    %1638 = vmatprep.mubr.bf16.mxu0 0
    %1639 = vmatmul.mubr.bf16.gmra.mrb[0].mxu0 %v729
    %v1640 = vpop.f32.mrb[0].mxu0
    %v1641 = vadd.f32 %v1496, %v1640
    %v1642 = vpop.f32.mrb[0].mxu0
    %v1643 = vpop.f32.mrb[0].mxu0
    %v1644 = vadd.f32 %v1499, %v1643
    %v1645 = vpop.f32.mrb[0].mxu0
    %1646 = vdwg.mxu0
    %v1647 = vld [vmem:[%s8] sm:$0x1]
    %v1649 = vlaneseq
    %v1650 = vshrl.u32 %v1649, 7
    %v1651 = vsub.s32 0, %v1650
    %v1652 = vrot.slane %v1647, %v1651
    %v1654 = vadd.f32 %v1585, %v1652
    %v1655 = vadd.f32 %v1588, %v1652
    %v1656 = vadd.f32 %v1593, %v1652
    %v1657 = vadd.f32 %v1596, %v1652
    %v1658 = vadd.f32 %v1601, %v1652
    %v1659 = vadd.f32 %v1604, %v1652
    %v1660 = vadd.f32 %v1609, %v1652
    %v1661 = vadd.f32 %v1612, %v1652
    %v1662 = vadd.f32 %v1617, %v1652
    %v1663 = vadd.f32 %v1620, %v1652
    %v1664 = vadd.f32 %v1625, %v1652
    %v1665 = vadd.f32 %v1628, %v1652
    %v1666 = vadd.f32 %v1633, %v1652
    %v1667 = vadd.f32 %v1636, %v1652
    %v1668 = vadd.f32 %v1641, %v1652
    %v1669 = vadd.f32 %v1644, %v1652
    %v1670 = vmax.f32 %v1654, 0.0
    %v1671 = vmax.f32 %v1655, 0.0
    %v1672 = vmax.f32 %v1656, 0.0
    %v1673 = vmax.f32 %v1657, 0.0
    %v1674 = vmax.f32 %v1658, 0.0
    %v1675 = vmax.f32 %v1659, 0.0
    %v1676 = vmax.f32 %v1660, 0.0
    %v1677 = vmax.f32 %v1661, 0.0
    %v1678 = vmax.f32 %v1662, 0.0
    %v1679 = vmax.f32 %v1663, 0.0
    %v1680 = vmax.f32 %v1664, 0.0
    %v1681 = vmax.f32 %v1665, 0.0
    %v1682 = vmax.f32 %v1666, 0.0
    %v1683 = vmax.f32 %v1667, 0.0
    %v1684 = vmax.f32 %v1668, 0.0
    %v1685 = vmax.f32 %v1669, 0.0
    %v1686 = vpack.c.bf16 %v1671, %v1670
    %v1687 = vpack.c.bf16 %v1673, %v1672
    %v1688 = vpack.c.bf16 %v1675, %v1674
    %v1689 = vpack.c.bf16 %v1677, %v1676
    %v1690 = vpack.c.bf16 %v1679, %v1678
    %v1691 = vpack.c.bf16 %v1681, %v1680
    %v1692 = vpack.c.bf16 %v1683, %v1682
    %v1693 = vpack.c.bf16 %v1685, %v1684
    %v1694 = vld [vmem:[#allocation7] sm:$0xf]
    %v1695 = vld [vmem:[#allocation7 + $0x4] sm:$0xf]
    %v1696 = vld [vmem:[#allocation7 + $0x8] sm:$0xf]
    %v1697 = vld [vmem:[#allocation7 + $0xc] sm:$0xf]
    %v1698 = vld [vmem:[#allocation7 + $0x10] sm:$0xf]
    %v1699 = vld [vmem:[#allocation7 + $0x14] sm:$0xf]
    %v1700 = vld [vmem:[#allocation7 + $0x18] sm:$0xf]
    %v1701 = vld [vmem:[#allocation7 + $0x1c] sm:$0xf]
    %v1710 = vunpack.c.l.b16 %v1694
    %v1711 = vunpack.c.l.b16 %v1695
    %v1712 = vunpack.c.l.b16 %v1696
    %v1713 = vunpack.c.l.b16 %v1697
    %v1714 = vunpack.c.l.b16 %v1698
    %v1715 = vunpack.c.l.b16 %v1699
    %v1716 = vunpack.c.l.b16 %v1700
    %v1717 = vunpack.c.l.b16 %v1701
    %v1718 = vpack.c.b16 %v1711, %v1710
    %v1719 = vpack.c.b16 %v1713, %v1712
    %v1720 = vpack.c.b16 %v1715, %v1714
    %v1721 = vpack.c.b16 %v1717, %v1716
    %1726 = vmatprep.subr.bf16.mxu0 0
    %1727 = vmatpush1.bf16.msra.mxu0 %v1686
    %1728 = vmatprep.subr.bf16.mxu0 0
    %1729 = vmatpush1.bf16.msra.mxu0 %v1687
    %1730 = vmatprep.subr.bf16.mxu0 0
    %1731 = vmatpush1.bf16.msra.mxu0 %v1688
    %1732 = vmatprep.subr.bf16.mxu0 0
    %1733 = vmatpush1.bf16.msra.mxu0 %v1689
    %1734 = vmatprep.subr.bf16.mxu0 0
    %1735 = vmatpush1.bf16.msra.mxu0 %v1690
    %1736 = vmatprep.subr.bf16.mxu0 0
    %1737 = vmatpush1.bf16.msra.mxu0 %v1691
    %1738 = vmatprep.subr.bf16.mxu0 0
    %1739 = vmatpush1.bf16.msra.mxu0 %v1692
    %1740 = vmatprep.subr.bf16.mxu0 0
    %1741 = vmatpush1.bf16.msra.mxu0 %v1693
    %1742 = vmatprep.subr.bf16.mxu0 0
    %1743 = vmatpush1.bf16.msra.mxu0 0
    %1744 = vmatprep.subr.bf16.mxu0 0
    %1745 = vmatpush1.bf16.msra.mxu0 0
    %1746 = vmatprep.subr.bf16.mxu0 0
    %1747 = vmatpush1.bf16.msra.mxu0 0
    %1748 = vmatprep.subr.bf16.mxu0 0
    %1749 = vmatpush1.bf16.msra.mxu0 0
    %1750 = vmatprep.subr.bf16.mxu0 0
    %1751 = vmatpush1.bf16.msra.mxu0 0
    %1752 = vmatprep.subr.bf16.mxu0 0
    %1753 = vmatpush1.bf16.msra.mxu0 0
    %1754 = vmatprep.subr.bf16.mxu0 0
    %1755 = vmatpush1.bf16.msra.mxu0 0
    %1756 = vmatprep.subr.bf16.mxu0 0
    %1757 = vmatpush1.bf16.msra.mxu0 0
    %1758 = vmatprep.mubr.bf16.mxu0 0
    %1759 = vmatmul.mubr.bf16.gmra.mrb[0].mxu0 %v1718
    %v1760 = vpop.f32.mrb[0].mxu0
    %v1761 = vadd.f32 0.0, %v1760
    %v1762 = vpop.f32.mrb[0].mxu0
    %v1763 = vpop.f32.mrb[0].mxu0
    %v1764 = vadd.f32 0.0, %v1763
    %v1765 = vpop.f32.mrb[0].mxu0
    %1766 = vmatprep.mubr.bf16.mxu0 0
    %1767 = vmatmul.mubr.bf16.gmra.mrb[0].mxu0 %v1719
    %v1768 = vpop.f32.mrb[0].mxu0
    %v1769 = vadd.f32 0.0, %v1768
    %v1770 = vpop.f32.mrb[0].mxu0
    %v1771 = vpop.f32.mrb[0].mxu0
    %v1772 = vadd.f32 0.0, %v1771
    %v1773 = vpop.f32.mrb[0].mxu0
    %1774 = vmatprep.mubr.bf16.mxu0 0
    %1775 = vmatmul.mubr.bf16.gmra.mrb[0].mxu0 %v1720
    %v1776 = vpop.f32.mrb[0].mxu0
    %v1777 = vadd.f32 0.0, %v1776
    %v1778 = vpop.f32.mrb[0].mxu0
    %v1779 = vpop.f32.mrb[0].mxu0
    %v1780 = vadd.f32 0.0, %v1779
    %v1781 = vpop.f32.mrb[0].mxu0
    %1782 = vmatprep.mubr.bf16.mxu0 0
    %1783 = vmatmul.mubr.bf16.gmra.mrb[0].mxu0 %v1721
    %v1784 = vpop.f32.mrb[0].mxu0
    %v1785 = vadd.f32 0.0, %v1784
    %v1786 = vpop.f32.mrb[0].mxu0
    %v1787 = vpop.f32.mrb[0].mxu0
    %v1788 = vadd.f32 0.0, %v1787
    %v1789 = vpop.f32.mrb[0].mxu0
    %1790 = vdwg.mxu0
    %v1791 = vld [vmem:[#allocation11] sm:$0xf]
    %v1792 = vld [vmem:[#allocation11 + $0x4] sm:$0xf]
    %v1793 = vld [vmem:[#allocation11 + $0x8] sm:$0xf]
    %v1794 = vld [vmem:[#allocation11 + $0xc] sm:$0xf]
    %v1795 = vld [vmem:[#allocation11 + $0x10] sm:$0xf]
    %v1796 = vld [vmem:[#allocation11 + $0x14] sm:$0xf]
    %v1797 = vld [vmem:[#allocation11 + $0x18] sm:$0xf]
    %v1798 = vld [vmem:[#allocation11 + $0x1c] sm:$0xf]
    %v1799 = vld [vmem:[#allocation11 + $0x20] sm:$0xf]
    %v1800 = vld [vmem:[#allocation11 + $0x24] sm:$0xf]
    %v1801 = vld [vmem:[#allocation11 + $0x28] sm:$0xf]
    %v1802 = vld [vmem:[#allocation11 + $0x2c] sm:$0xf]
    %v1803 = vld [vmem:[#allocation11 + $0x30] sm:$0xf]
    %v1804 = vld [vmem:[#allocation11 + $0x34] sm:$0xf]
    %v1805 = vld [vmem:[#allocation11 + $0x38] sm:$0xf]
    %v1806 = vld [vmem:[#allocation11 + $0x3c] sm:$0xf]
    %v1807 = vpack.c.bf16 %v1764, %v1761
    %v1808 = vpack.c.bf16 %v1772, %v1769
    %v1809 = vpack.c.bf16 %v1780, %v1777
    %v1810 = vpack.c.bf16 %v1788, %v1785
    %v1811 = vld [vmem:[#allocation14] sm:$0xf]
    %v1812 = vld [vmem:[#allocation14 + $0x4] sm:$0xf]
    %v1813 = vld [vmem:[#allocation14 + $0x8] sm:$0xf]
    %v1814 = vld [vmem:[#allocation14 + $0xc] sm:$0xf]
    %v1815 = vld [vmem:[#allocation14 + $0x10] sm:$0xf]
    %v1816 = vld [vmem:[#allocation14 + $0x14] sm:$0xf]
    %v1817 = vld [vmem:[#allocation14 + $0x18] sm:$0xf]
    %v1818 = vld [vmem:[#allocation14 + $0x1c] sm:$0xf]
    %v1819 = vld [vmem:[#allocation14 + $0x20] sm:$0xf]
    %v1820 = vld [vmem:[#allocation14 + $0x24] sm:$0xf]
    %v1821 = vld [vmem:[#allocation14 + $0x28] sm:$0xf]
    %v1822 = vld [vmem:[#allocation14 + $0x2c] sm:$0xf]
    %v1823 = vld [vmem:[#allocation14 + $0x30] sm:$0xf]
    %v1824 = vld [vmem:[#allocation14 + $0x34] sm:$0xf]
    %v1825 = vld [vmem:[#allocation14 + $0x38] sm:$0xf]
    %v1826 = vld [vmem:[#allocation14 + $0x3c] sm:$0xf]
    %v1843 = vunpack.c.l.b16 %v1811
    %v1844 = vunpack.c.l.b16 %v1812
    %v1845 = vunpack.c.l.b16 %v1813
    %v1846 = vunpack.c.l.b16 %v1814
    %v1847 = vunpack.c.l.b16 %v1815
    %v1848 = vunpack.c.l.b16 %v1816
    %v1849 = vunpack.c.l.b16 %v1817
    %v1850 = vunpack.c.l.b16 %v1818
    %v1851 = vunpack.c.l.b16 %v1819
    %v1852 = vunpack.c.l.b16 %v1820
    %v1853 = vunpack.c.l.b16 %v1821
    %v1854 = vunpack.c.l.b16 %v1822
    %v1855 = vunpack.c.l.b16 %v1823
    %v1856 = vunpack.c.l.b16 %v1824
    %v1857 = vunpack.c.l.b16 %v1825
    %v1858 = vunpack.c.l.b16 %v1826
    %v1859 = vpack.c.b16 %v1844, %v1843
    %v1860 = vpack.c.b16 %v1846, %v1845
    %v1861 = vpack.c.b16 %v1848, %v1847
    %v1862 = vpack.c.b16 %v1850, %v1849
    %v1863 = vpack.c.b16 %v1852, %v1851
    %v1864 = vpack.c.b16 %v1854, %v1853
    %v1865 = vpack.c.b16 %v1856, %v1855
    %v1866 = vpack.c.b16 %v1858, %v1857
    %1875 = vmatprep.subr.bf16.mxu0 0
    %1876 = vmatpush1.bf16.msra.mxu0 %v1859
    %1877 = vmatprep.subr.bf16.mxu0 0
    %1878 = vmatpush1.bf16.msra.mxu0 %v1860
    %1879 = vmatprep.subr.bf16.mxu0 0
    %1880 = vmatpush1.bf16.msra.mxu0 %v1861
    %1881 = vmatprep.subr.bf16.mxu0 0
    %1882 = vmatpush1.bf16.msra.mxu0 %v1862
    %1883 = vmatprep.subr.bf16.mxu0 0
    %1884 = vmatpush1.bf16.msra.mxu0 %v1863
    %1885 = vmatprep.subr.bf16.mxu0 0
    %1886 = vmatpush1.bf16.msra.mxu0 %v1864
    %1887 = vmatprep.subr.bf16.mxu0 0
    %1888 = vmatpush1.bf16.msra.mxu0 %v1865
    %1889 = vmatprep.subr.bf16.mxu0 0
    %1890 = vmatpush1.bf16.msra.mxu0 %v1866
    %1891 = vmatprep.subr.bf16.mxu0 0
    %1892 = vmatpush1.bf16.msra.mxu0 0
    %1893 = vmatprep.subr.bf16.mxu0 0
    %1894 = vmatpush1.bf16.msra.mxu0 0
    %1895 = vmatprep.subr.bf16.mxu0 0
    %1896 = vmatpush1.bf16.msra.mxu0 0
    %1897 = vmatprep.subr.bf16.mxu0 0
    %1898 = vmatpush1.bf16.msra.mxu0 0
    %1899 = vmatprep.subr.bf16.mxu0 0
    %1900 = vmatpush1.bf16.msra.mxu0 0
    %1901 = vmatprep.subr.bf16.mxu0 0
    %1902 = vmatpush1.bf16.msra.mxu0 0
    %1903 = vmatprep.subr.bf16.mxu0 0
    %1904 = vmatpush1.bf16.msra.mxu0 0
    %1905 = vmatprep.subr.bf16.mxu0 0
    %1906 = vmatpush1.bf16.msra.mxu0 0
    %1907 = vmatprep.mubr.bf16.mxu0 0
    %1908 = vmatmul.mubr.bf16.gmra.mrb[0].mxu0 %v1807
    %v1909 = vpop.f32.mrb[0].mxu0
    %v1910 = vadd.f32 0.0, %v1909
    %v1911 = vpop.f32.mrb[0].mxu0
    %v1912 = vpop.f32.mrb[0].mxu0
    %v1913 = vadd.f32 0.0, %v1912
    %v1914 = vpop.f32.mrb[0].mxu0
    %1915 = vmatprep.mubr.bf16.mxu0 0
    %1916 = vmatmul.mubr.bf16.gmra.mrb[0].mxu0 %v1808
    %v1917 = vpop.f32.mrb[0].mxu0
    %v1918 = vadd.f32 0.0, %v1917
    %v1919 = vpop.f32.mrb[0].mxu0
    %v1920 = vpop.f32.mrb[0].mxu0
    %v1921 = vadd.f32 0.0, %v1920
    %v1922 = vpop.f32.mrb[0].mxu0
    %1923 = vmatprep.mubr.bf16.mxu0 0
    %1924 = vmatmul.mubr.bf16.gmra.mrb[0].mxu0 %v1809
    %v1925 = vpop.f32.mrb[0].mxu0
    %v1926 = vadd.f32 0.0, %v1925
    %v1927 = vpop.f32.mrb[0].mxu0
    %v1928 = vpop.f32.mrb[0].mxu0
    %v1929 = vadd.f32 0.0, %v1928
    %v1930 = vpop.f32.mrb[0].mxu0
    %1931 = vmatprep.mubr.bf16.mxu0 0
    %1932 = vmatmul.mubr.bf16.gmra.mrb[0].mxu0 %v1810
    %v1933 = vpop.f32.mrb[0].mxu0
    %v1934 = vadd.f32 0.0, %v1933
    %v1935 = vpop.f32.mrb[0].mxu0
    %v1936 = vpop.f32.mrb[0].mxu0
    %v1937 = vadd.f32 0.0, %v1936
    %v1938 = vpop.f32.mrb[0].mxu0
    %1939 = vdwg.mxu0
    %v1956 = vunpack.c.l.b16 %v1791
    %v1957 = vunpack.c.l.b16 %v1792
    %v1958 = vunpack.c.l.b16 %v1793
    %v1959 = vunpack.c.l.b16 %v1794
    %v1960 = vunpack.c.l.b16 %v1795
    %v1961 = vunpack.c.l.b16 %v1796
    %v1962 = vunpack.c.l.b16 %v1797
    %v1963 = vunpack.c.l.b16 %v1798
    %v1964 = vunpack.c.l.b16 %v1799
    %v1965 = vunpack.c.l.b16 %v1800
    %v1966 = vunpack.c.l.b16 %v1801
    %v1967 = vunpack.c.l.b16 %v1802
    %v1968 = vunpack.c.l.b16 %v1803
    %v1969 = vunpack.c.l.b16 %v1804
    %v1970 = vunpack.c.l.b16 %v1805
    %v1971 = vunpack.c.l.b16 %v1806
    %v1972 = vpack.c.b16 %v1957, %v1956
    %v1973 = vpack.c.b16 %v1959, %v1958
    %v1974 = vpack.c.b16 %v1961, %v1960
    %v1975 = vpack.c.b16 %v1963, %v1962
    %v1976 = vpack.c.b16 %v1965, %v1964
    %v1977 = vpack.c.b16 %v1967, %v1966
    %v1978 = vpack.c.b16 %v1969, %v1968
    %v1979 = vpack.c.b16 %v1971, %v1970
    %1988 = vmatprep.subr.bf16.mxu0 0
    %1989 = vmatpush1.bf16.msra.mxu0 %v1972
    %1990 = vmatprep.subr.bf16.mxu0 0
    %1991 = vmatpush1.bf16.msra.mxu0 %v1973
    %1992 = vmatprep.subr.bf16.mxu0 0
    %1993 = vmatpush1.bf16.msra.mxu0 %v1974
    %1994 = vmatprep.subr.bf16.mxu0 0
    %1995 = vmatpush1.bf16.msra.mxu0 %v1975
    %1996 = vmatprep.subr.bf16.mxu0 0
    %1997 = vmatpush1.bf16.msra.mxu0 %v1976
    %1998 = vmatprep.subr.bf16.mxu0 0
    %1999 = vmatpush1.bf16.msra.mxu0 %v1977
    %2000 = vmatprep.subr.bf16.mxu0 0
    %2001 = vmatpush1.bf16.msra.mxu0 %v1978
    %2002 = vmatprep.subr.bf16.mxu0 0
    %2003 = vmatpush1.bf16.msra.mxu0 %v1979
    %2004 = vmatprep.subr.bf16.mxu0 0
    %2005 = vmatpush1.bf16.msra.mxu0 0
    %2006 = vmatprep.subr.bf16.mxu0 0
    %2007 = vmatpush1.bf16.msra.mxu0 0
    %2008 = vmatprep.subr.bf16.mxu0 0
    %2009 = vmatpush1.bf16.msra.mxu0 0
    %2010 = vmatprep.subr.bf16.mxu0 0
    %2011 = vmatpush1.bf16.msra.mxu0 0
    %2012 = vmatprep.subr.bf16.mxu0 0
    %2013 = vmatpush1.bf16.msra.mxu0 0
    %2014 = vmatprep.subr.bf16.mxu0 0
    %2015 = vmatpush1.bf16.msra.mxu0 0
    %2016 = vmatprep.subr.bf16.mxu0 0
    %2017 = vmatpush1.bf16.msra.mxu0 0
    %2018 = vmatprep.subr.bf16.mxu0 0
    %2019 = vmatpush1.bf16.msra.mxu0 0
    %2020 = vmatprep.mubr.bf16.mxu0 0
    %2021 = vmatmul.mubr.bf16.gmra.mrb[0].mxu0 %v1686
    %v2022 = vpop.f32.mrb[0].mxu0
    %v2023 = vadd.f32 %v1910, %v2022
    %v2024 = vpop.f32.mrb[0].mxu0
    %v2025 = vpop.f32.mrb[0].mxu0
    %v2026 = vadd.f32 %v1913, %v2025
    %v2027 = vpop.f32.mrb[0].mxu0
    %2028 = vmatprep.mubr.bf16.mxu0 0
    %2029 = vmatmul.mubr.bf16.gmra.mrb[0].mxu0 %v1687
    %v2030 = vpop.f32.mrb[0].mxu0
    %v2031 = vadd.f32 %v1918, %v2030
    %v2032 = vpop.f32.mrb[0].mxu0
    %v2033 = vpop.f32.mrb[0].mxu0
    %v2034 = vadd.f32 %v1921, %v2033
    %v2035 = vpop.f32.mrb[0].mxu0
    %2036 = vmatprep.mubr.bf16.mxu0 0
    %2037 = vmatmul.mubr.bf16.gmra.mrb[0].mxu0 %v1688
    %v2038 = vpop.f32.mrb[0].mxu0
    %v2039 = vadd.f32 %v1926, %v2038
    %v2040 = vpop.f32.mrb[0].mxu0
    %v2041 = vpop.f32.mrb[0].mxu0
    %v2042 = vadd.f32 %v1929, %v2041
    %v2043 = vpop.f32.mrb[0].mxu0
    %2044 = vmatprep.mubr.bf16.mxu0 0
    %2045 = vmatmul.mubr.bf16.gmra.mrb[0].mxu0 %v1689
    %v2046 = vpop.f32.mrb[0].mxu0
    %v2047 = vadd.f32 %v1934, %v2046
    %v2048 = vpop.f32.mrb[0].mxu0
    %v2049 = vpop.f32.mrb[0].mxu0
    %v2050 = vadd.f32 %v1937, %v2049
    %v2051 = vpop.f32.mrb[0].mxu0
    %2052 = vdwg.mxu0
    %v2053 = vld [vmem:[%s9] sm:$0x1]
    %v2055 = vlaneseq
    %v2056 = vshrl.u32 %v2055, 7
    %v2057 = vsub.s32 0, %v2056
    %v2058 = vrot.slane %v2053, %v2057
    %v2060 = vadd.f32 %v2023, %v2058
    %v2061 = vadd.f32 %v2026, %v2058
    %v2062 = vadd.f32 %v2031, %v2058
    %v2063 = vadd.f32 %v2034, %v2058
    %v2064 = vadd.f32 %v2039, %v2058
    %v2065 = vadd.f32 %v2042, %v2058
    %v2066 = vadd.f32 %v2047, %v2058
    %v2067 = vadd.f32 %v2050, %v2058
    %2068 = vst [vmem:[#allocation16] sm:$0xff] %v2060
    %2069 = vst [vmem:[#allocation16 + $0x8] sm:$0xff] %v2061
    %2070 = vst [vmem:[#allocation16 + $0x10] sm:$0xff] %v2062
    %2071 = vst [vmem:[#allocation16 + $0x18] sm:$0xff] %v2063
    %2072 = vst [vmem:[#allocation16 + $0x20] sm:$0xff] %v2064
    %2073 = vst [vmem:[#allocation16 + $0x28] sm:$0xff] %v2065
    %2074 = vst [vmem:[#allocation16 + $0x30] sm:$0xff] %v2066
    %2075 = vst [vmem:[#allocation16 + $0x38] sm:$0xff] %v2067
    // Predicated region
    $region74: #{tpu_custom_call.1} parent=1 // pred_check
      _
    $region75: #{tpu_custom_call.1} parent=1 // pred_check_branch
      %2077 = sbr.rel (0) target = $region77
    $region76: #{tpu_custom_call.1} parent=1 // pred_region
      %s2079 = ssub.s32 1024, 1024
      %2080 = vsyncadd [#allocation4], %s2079
      %s2081 = sshll.u32 [#allocation16], 4
      %s2082 = int_to_ptr.vmem [resolvable:$true] %s2081
      %2087 = dma.vmem_to_hbm [thread:$0]  %s2082, 1024, %s10, [#allocation4], 128, 128, 8
    $region77: #{tpu_custom_call.1} parent=1 // pred_fallthru
      _
    // Predicated region
    $region78: #{tpu_custom_call.1} parent=1 // pred_check
      _
    $region79: #{tpu_custom_call.1} parent=1 // pred_check_branch
      %2089 = sbr.rel (0) target = $region81
    $region80: #{tpu_custom_call.1} parent=1 // pred_region
      %2090 = dma.done [#allocation4], 1024
    $region81: #{tpu_custom_call.1} parent=1 // pred_fallthru
      _
    %2091 = vsyncpa [#allocation3], 1
    %2092 = vsyncpa [#allocation6], 1
    %2093 = vsyncpa [#allocation9], 1
    %2094 = vsyncpa [#allocation12], 1
    %2095 = vsyncpa [#allocation15], 1
    %2096 = vsyncpa [#allocation4], 1

</llo_original>
